<compile_context>
chip_gen: v6e
topology: v6e:2x2x1
jax: 0.10.0
libtpu: 0.0.40
codegen_flags: <defaults>
</compile_context>

<pallas_src>
import functools

import jax
import jax.numpy as jnp
from jax import lax
from jax.experimental import pallas as pl
from jax.experimental.pallas import tpu as pltpu


def _round_up(x, m):
    return ((x + m - 1) // m) * m


def _cdiv(a, b):
    return (a + b - 1) // b


def _default_batch_tile():
    # v5e: 4x128 MXU, single vector-store slot -> smaller batch tile;
    # v6e/v7x: 256-wide MXU -> 256.
    try:
        kind = jax.devices()[0].device_kind.lower()
    except Exception:
        return 256
    return 128 if "v5" in kind else 256


def _vmem_capacity_bytes():
    # v5e/v6e: 128 MiB, v7x: 64 MiB per TC.  Fall back to the smallest.
    try:
        return int(pltpu.get_tpu_info().vmem_capacity_bytes)
    except Exception:
        return 64 << 20


def _pick_n_chunks(tb):
    # Sub-chunk the batch tile so chunk i's (st*reset)@wos matmul overlaps
    # chunk i+1's gx/gs matmuls and sigmoid/tanh (EUP) work.
    if tb % 32 == 0 and tb // 4 >= 64:
        return 4
    if tb % 16 == 0 and tb // 2 >= 64:
        return 2
    return 1


def gru_kernel(xt_ref, st_ref, wx3_ref, ws2_ref, wos_ref, b3_ref, out_ref,
               *, s_pad, n_chunks, chunk):
    b3 = b3_ref[...].astype(jnp.float32)

    def compute(xt, st):
        # xt contribution for all three gates in one wide MXU matmul + bias.
        gx = jnp.dot(xt, wx3_ref[...], preferred_element_type=jnp.float32) + b3
        # st contribution for update/reset gates in one wide MXU matmul.
        gs = jnp.dot(st, ws2_ref[...], preferred_element_type=jnp.float32)

        update = jax.nn.sigmoid(gx[:, :s_pad] + gs[:, :s_pad])
        reset = jax.nn.sigmoid(gx[:, s_pad:2 * s_pad] + gs[:, s_pad:])

        st_f = st.astype(jnp.float32)
        st_reset = (st_f * reset).astype(wos_ref.dtype)   # native dtype -> MXU
        zo = gx[:, 2 * s_pad:] + jnp.dot(st_reset, wos_ref[...],
                                         preferred_element_type=jnp.float32)
        out_inputs = jnp.tanh(zo)
        # st*(1-u) + o*u  ==  st + u*(o - st)  (one fewer VPU op per element)
        return st_f + update * (out_inputs - st_f)

    if n_chunks == 1:
        out_ref[...] = compute(xt_ref[...], st_ref[...]).astype(out_ref.dtype)
    else:
        def body(c, carry):
            r0 = pl.multiple_of(c * chunk, chunk)
            new_st = compute(xt_ref[pl.ds(r0, chunk), :],
                             st_ref[pl.ds(r0, chunk), :])
            out_ref[pl.ds(r0, chunk), :] = new_st.astype(out_ref.dtype)
            return carry

        lax.fori_loop(0, n_chunks, body, 0, unroll=True)


def gru_forward(xt, st, params, *, batch_tile=None, mxu_dtype=None):
    """xt: (B, I), st: (B, S) -> new_st: (B, S).

    mxu_dtype: optional dtype (e.g. jnp.bfloat16) for the matmul operands
    (weights + activations).  Accumulation and gate math stay in f32.
    """
    B, I = xt.shape
    _, S = st.shape
    out_dtype = st.dtype

    if batch_tile is None:
        batch_tile = _default_batch_tile()

    (wux, wus, bu, wrx, wrs, br, wox, wos, bo) = params
    if mxu_dtype is not None:
        cast = lambda a: a.astype(mxu_dtype)
        wux, wus, wrx, wrs, wox, wos = map(cast, (wux, wus, wrx, wrs, wox, wos))
        xt, st = cast(xt), cast(st)

    # (8, 128)-aligned, lane-dense padded sizes (layout plumbing only).
    S_pad = _round_up(S, 128)
    I_pad = _round_up(I, 128)

    # Batch tiling: minimize zero-row padding waste; with a single tile but
    # enough rows, split in two so v7x's second TensorCore gets work
    # (one extra, cheap grid step on v5e/v6e).
    B_pad8 = _round_up(B, 8)
    n_tiles = _cdiv(B_pad8, batch_tile)
    if n_tiles == 1 and B_pad8 >= 16:
        n_tiles = 2
    TB = _round_up(_cdiv(B_pad8, n_tiles), 8)
    B_pad = TB * n_tiles

    n_chunks = _pick_n_chunks(TB)
    chunk = TB // n_chunks

    def pad2(a, r, c):
        return jnp.pad(a, ((0, r - a.shape[0]), (0, c - a.shape[1])))

    # Fuse gate weights along N: [update | reset | out].
    wx3 = jnp.concatenate([pad2(wux, I_pad, S_pad),
                           pad2(wrx, I_pad, S_pad),
                           pad2(wox, I_pad, S_pad)], axis=1)   # (I_pad, 3*S_pad)
    ws2 = jnp.concatenate([pad2(wus, S_pad, S_pad),
                           pad2(wrs, S_pad, S_pad)], axis=1)   # (S_pad, 2*S_pad)
    wosp = pad2(wos, S_pad, S_pad)                             # (S_pad, S_pad)
    b3 = jnp.concatenate([pad2(bu.reshape(1, -1), 1, S_pad),
                          pad2(br.reshape(1, -1), 1, S_pad),
                          pad2(bo.reshape(1, -1), 1, S_pad)], axis=1)  # (1, 3*S_pad)

    xt_p = pad2(xt, B_pad, I_pad)
    st_p = pad2(st, B_pad, S_pad)

    w_isz = jnp.dtype(wx3.dtype).itemsize
    a_isz = jnp.dtype(xt_p.dtype).itemsize
    o_isz = jnp.dtype(out_dtype).itemsize
    b_isz = jnp.dtype(b3.dtype).itemsize
    weight_bytes = (w_isz * (I_pad * 3 * S_pad + S_pad * 2 * S_pad + S_pad * S_pad)
                    + b_isz * 3 * S_pad)
    tile_bytes = a_isz * (TB * I_pad + TB * S_pad) + o_isz * TB * S_pad
    # Rough in-flight f32 intermediates per sub-chunk (gx, gs, gates, acc).
    interm_bytes = 4 * chunk * 8 * S_pad
    vmem_cap = _vmem_capacity_bytes()

    kern = functools.partial(gru_kernel, s_pad=S_pad,
                             n_chunks=n_chunks, chunk=chunk)

    def build(single_buffer_weights):
        # Constant-index weight operands are never re-fetched across batch
        # tiles; single-buffer them so they do not cost 2x VMEM.
        wkw = ({"pipeline_mode": pl.Buffered(1)}
               if single_buffer_weights else {})
        nbuf = 1 if single_buffer_weights else 2
        vmem_bytes = (nbuf * weight_bytes + 2 * tile_bytes
                      + interm_bytes + (8 << 20))
        vmem_limit = int(min(vmem_bytes, int(vmem_cap * 0.9)))
        return pl.pallas_call(
            kern,
            out_shape=jax.ShapeDtypeStruct((B_pad, S_pad), out_dtype),
            grid=(n_tiles,),
            in_specs=[
                pl.BlockSpec((TB, I_pad), lambda i: (i, 0)),
                pl.BlockSpec((TB, S_pad), lambda i: (i, 0)),
                pl.BlockSpec((I_pad, 3 * S_pad), lambda i: (0, 0), **wkw),
                pl.BlockSpec((S_pad, 2 * S_pad), lambda i: (0, 0), **wkw),
                pl.BlockSpec((S_pad, S_pad), lambda i: (0, 0), **wkw),
                pl.BlockSpec((1, 3 * S_pad), lambda i: (0, 0), **wkw),
            ],
            out_specs=pl.BlockSpec((TB, S_pad), lambda i: (i, 0)),
            compiler_params=pltpu.CompilerParams(
                dimension_semantics=("parallel",),
                vmem_limit_bytes=vmem_limit,
            ),
        )

    try:
        out_p = build(True)(xt_p, st_p, wx3, ws2, wosp, b3)
    except Exception:
        # Fallback if single-buffered pipeline_mode is rejected by this
        # Pallas version: default double-buffering (correct, more VMEM).
        out_p = build(False)(xt_p, st_p, wx3, ws2, wosp, b3)

    return out_p[:B, :S]


def init_gru_params(key, input_size, st_size, dtype=jnp.float32):
    """Deterministic init mirroring the PyTorch module:
    orthogonal weights (st_size, input_size+st_size), uniform biases."""
    ks = jax.random.split(key, 6)
    ortho = jax.nn.initializers.orthogonal()
    in_features = input_size + st_size
    bound = 1.0 / jnp.sqrt(in_features)

    def make_gate(kw, kb):
        w = ortho(kw, (st_size, in_features), dtype)      # (S, I+S), PyTorch layout
        b = jax.random.uniform(kb, (st_size,), dtype, -bound, bound)
        wt = w.T                                          # (I+S, S)
        wx = wt[:input_size, :]                           # (I, S)
        ws = wt[input_size:, :]                           # (S, S)
        return wx, ws, b.reshape(1, st_size)

    wrx, wrs, br = make_gate(ks[0], ks[1])   # reset_gate
    wux, wus, bu = make_gate(ks[2], ks[3])   # update_gate
    wox, wos, bo = make_gate(ks[4], ks[5])   # out_gate
    return (wux, wus, bu, wrx, wrs, br, wox, wos, bo)


def gru_reference(xt, st, params):
    """Pure-JAX reference matching the PyTorch forward."""
    (wux, wus, bu, wrx, wrs, br, wox, wos, bo) = params
    update = jax.nn.sigmoid(xt @ wux + st @ wus + bu)
    reset = jax.nn.sigmoid(xt @ wrx + st @ wrs + br)
    out_inputs = jnp.tanh(xt @ wox + (st * reset) @ wos + bo)
    return st * (1.0 - update) + out_inputs * update


if __name__ == "__main__":
    input_size = 16
    st_size = 32
    batch = 2

    key = jax.random.PRNGKey(0)
    k_x, k_s, k_p = jax.random.split(key, 3)

    xt = jax.random.normal(k_x, (batch, input_size), jnp.float32)
    st = jax.random.normal(k_s, (batch, st_size), jnp.float32)
    params = init_gru_params(k_p, input_size, st_size)

    ref = gru_reference(xt, st, params)

    # f32 path (exact vs reference).
    new_st = jax.block_until_ready(gru_forward(xt, st, params))
    assert new_st.shape == (batch, st_size)
    assert jnp.allclose(new_st, ref, atol=1e-5, rtol=1e-5), "mismatch vs reference"

    # bf16 MXU fast path (looser tolerance; accumulation stays f32).
    new_st_bf16 = jax.block_until_ready(
        gru_forward(xt, st, params, mxu_dtype=jnp.bfloat16))
    assert new_st_bf16.shape == (batch, st_size)
    assert jnp.allclose(new_st_bf16, ref, atol=5e-2, rtol=5e-2), "bf16 path mismatch"

    print("KERNEL_OK")
</pallas_src>

<mosaic_0001>
module attributes {stable_mosaic.version = 11 : i64} {
  func.func @gru_kernel(%arg0: i32, %arg1: memref<8x128xf32, #tpu.memory_space<vmem>>, %arg2: memref<8x128xf32, #tpu.memory_space<vmem>>, %arg3: memref<128x384xf32, #tpu.memory_space<vmem>>, %arg4: memref<128x256xf32, #tpu.memory_space<vmem>>, %arg5: memref<128x128xf32, #tpu.memory_space<vmem>>, %arg6: memref<1x384xf32, #tpu.memory_space<vmem>>, %arg7: memref<8x128xf32, #tpu.memory_space<vmem>>) attributes {dimension_semantics = [#tpu.dimension_semantics<parallel>], iteration_bounds = array<i64: 1>, scalar_prefetch = 0 : i64, scratch_operands = 0 : i64, tpu.core_type = #tpu.core_type<tc>, window_params = [{transform_indices = @transform_0, window_bounds = array<i64: 8, 128>}, {transform_indices = @transform_1, window_bounds = array<i64: 8, 128>}, {pipeline_mode = #tpu.pipeline_mode<synchronous>, transform_indices = @transform_2, window_bounds = array<i64: 128, 384>}, {pipeline_mode = #tpu.pipeline_mode<synchronous>, transform_indices = @transform_3, window_bounds = array<i64: 128, 256>}, {pipeline_mode = #tpu.pipeline_mode<synchronous>, transform_indices = @transform_4, window_bounds = array<i64: 128, 128>}, {pipeline_mode = #tpu.pipeline_mode<synchronous>, transform_indices = @transform_5, window_bounds = array<i64: 1, 384>}, {transform_indices = @transform_6, window_bounds = array<i64: 8, 128>}]} {
    %c0 = arith.constant 0 : index
    %c0_0 = arith.constant 0 : index
    %0 = vector.load %arg6[%c0, %c0_0] : memref<1x384xf32, #tpu.memory_space<vmem>>, vector<1x384xf32>
    %c0_1 = arith.constant 0 : index
    %c0_2 = arith.constant 0 : index
    %1 = vector.load %arg1[%c0_1, %c0_2] : memref<8x128xf32, #tpu.memory_space<vmem>>, vector<8x128xf32>
    %c0_3 = arith.constant 0 : index
    %c0_4 = arith.constant 0 : index
    %2 = vector.load %arg2[%c0_3, %c0_4] : memref<8x128xf32, #tpu.memory_space<vmem>>, vector<8x128xf32>
    %c0_5 = arith.constant 0 : index
    %c0_6 = arith.constant 0 : index
    %3 = vector.load %arg3[%c0_5, %c0_6] : memref<128x384xf32, #tpu.memory_space<vmem>>, vector<128x384xf32>
    %cst = arith.constant dense<0.000000e+00> : vector<8x384xf32>
    %4 = tpu.matmul %1, %3, %cst {dimension_numbers = #tpu.dot_dimension_numbers<[1], [0], [0], [1], [0, 0, 1, 1], [], []>} : vector<8x128xf32>, vector<128x384xf32>, vector<8x384xf32> -> vector<8x384xf32>
    %5 = vector.broadcast %0 : vector<1x384xf32> to vector<8x384xf32>
    %6 = arith.addf %4, %5 : vector<8x384xf32>
    %c0_7 = arith.constant 0 : index
    %c0_8 = arith.constant 0 : index
    %7 = vector.load %arg4[%c0_7, %c0_8] : memref<128x256xf32, #tpu.memory_space<vmem>>, vector<128x256xf32>
    %cst_9 = arith.constant dense<0.000000e+00> : vector<8x256xf32>
    %8 = tpu.matmul %2, %7, %cst_9 {dimension_numbers = #tpu.dot_dimension_numbers<[1], [0], [0], [1], [0, 0, 1, 1], [], []>} : vector<8x128xf32>, vector<128x256xf32>, vector<8x256xf32> -> vector<8x256xf32>
    %9 = vector.extract_strided_slice %6 {offsets = [0, 0], sizes = [8, 128], strides = [1, 1]} : vector<8x384xf32> to vector<8x128xf32>
    %10 = vector.extract_strided_slice %8 {offsets = [0, 0], sizes = [8, 128], strides = [1, 1]} : vector<8x256xf32> to vector<8x128xf32>
    %11 = arith.addf %9, %10 : vector<8x128xf32>
    %12 = arith.negf %11 : vector<8x128xf32>
    %13 = math.exp %12 : vector<8x128xf32>
    %cst_10 = arith.constant 1.000000e+00 : f32
    %14 = vector.broadcast %cst_10 : f32 to vector<8x128xf32>
    %15 = arith.addf %14, %13 : vector<8x128xf32>
    %16 = arith.divf %14, %15 : vector<8x128xf32>
    %17 = vector.extract_strided_slice %6 {offsets = [0, 128], sizes = [8, 128], strides = [1, 1]} : vector<8x384xf32> to vector<8x128xf32>
    %18 = vector.extract_strided_slice %8 {offsets = [0, 128], sizes = [8, 128], strides = [1, 1]} : vector<8x256xf32> to vector<8x128xf32>
    %19 = arith.addf %17, %18 : vector<8x128xf32>
    %20 = arith.negf %19 : vector<8x128xf32>
    %21 = math.exp %20 : vector<8x128xf32>
    %cst_11 = arith.constant 1.000000e+00 : f32
    %22 = vector.broadcast %cst_11 : f32 to vector<8x128xf32>
    %23 = arith.addf %22, %21 : vector<8x128xf32>
    %24 = arith.divf %22, %23 : vector<8x128xf32>
    %25 = arith.mulf %2, %24 : vector<8x128xf32>
    %26 = vector.extract_strided_slice %6 {offsets = [0, 256], sizes = [8, 128], strides = [1, 1]} : vector<8x384xf32> to vector<8x128xf32>
    %c0_12 = arith.constant 0 : index
    %c0_13 = arith.constant 0 : index
    %27 = vector.load %arg5[%c0_12, %c0_13] : memref<128x128xf32, #tpu.memory_space<vmem>>, vector<128x128xf32>
    %cst_14 = arith.constant dense<0.000000e+00> : vector<8x128xf32>
    %28 = tpu.matmul %25, %27, %cst_14 {dimension_numbers = #tpu.dot_dimension_numbers<[1], [0], [0], [1], [0, 0, 1, 1], [], []>} : vector<8x128xf32>, vector<128x128xf32>, vector<8x128xf32> -> vector<8x128xf32>
    %29 = arith.addf %26, %28 : vector<8x128xf32>
    %30 = math.tanh %29 : vector<8x128xf32>
    %31 = arith.subf %30, %2 : vector<8x128xf32>
    %32 = arith.mulf %16, %31 : vector<8x128xf32>
    %33 = arith.addf %2, %32 : vector<8x128xf32>
    %c0_15 = arith.constant 0 : index
    %c0_16 = arith.constant 0 : index
    %34 = vector.load %arg7[%c0_15, %c0_16] : memref<8x128xf32, #tpu.memory_space<vmem>>, vector<8x128xf32>
    tpu.vector_store %arg7[%c0_15, %c0_16], %33 {strides = array<i32>} : memref<8x128xf32, #tpu.memory_space<vmem>>, vector<8x128xf32>,
    return
  }
  func.func @transform_0(%arg0: i32) -> (i32, i32) {
    %c0_i32 = arith.constant 0 : i32
    %c0_i32_0 = arith.constant 0 : i32
    return %arg0, %c0_i32 : i32, i32
  }
  func.func @transform_1(%arg0: i32) -> (i32, i32) {
    %c0_i32 = arith.constant 0 : i32
    %c0_i32_0 = arith.constant 0 : i32
    return %arg0, %c0_i32 : i32, i32
  }
  func.func @transform_2(%arg0: i32) -> (i32, i32) {
    %c0_i32 = arith.constant 0 : i32
    %c0_i32_0 = arith.constant 0 : i32
    %c0_i32_1 = arith.constant 0 : i32
    return %c0_i32, %c0_i32_0 : i32, i32
  }
  func.func @transform_3(%arg0: i32) -> (i32, i32) {
    %c0_i32 = arith.constant 0 : i32
    %c0_i32_0 = arith.constant 0 : i32
    %c0_i32_1 = arith.constant 0 : i32
    return %c0_i32, %c0_i32_0 : i32, i32
  }
  func.func @transform_4(%arg0: i32) -> (i32, i32) {
    %c0_i32 = arith.constant 0 : i32
    %c0_i32_0 = arith.constant 0 : i32
    %c0_i32_1 = arith.constant 0 : i32
    return %c0_i32, %c0_i32_0 : i32, i32
  }
  func.func @transform_5(%arg0: i32) -> (i32, i32) {
    %c0_i32 = arith.constant 0 : i32
    %c0_i32_0 = arith.constant 0 : i32
    %c0_i32_1 = arith.constant 0 : i32
    return %c0_i32, %c0_i32_0 : i32, i32
  }
  func.func @transform_6(%arg0: i32) -> (i32, i32) {
    %c0_i32 = arith.constant 0 : i32
    %c0_i32_0 = arith.constant 0 : i32
    return %arg0, %c0_i32 : i32, i32
  }
}

module attributes {stable_mosaic.version = 11 : i64} {
  func.func @gru_kernel(%arg0: i32, %arg1: memref<8x128xf32, #tpu.memory_space<vmem>>, %arg2: memref<8x128xf32, #tpu.memory_space<vmem>>, %arg3: memref<128x384xf32, #tpu.memory_space<vmem>>, %arg4: memref<128x256xf32, #tpu.memory_space<vmem>>, %arg5: memref<128x128xf32, #tpu.memory_space<vmem>>, %arg6: memref<1x384xf32, #tpu.memory_space<vmem>>, %arg7: memref<8x128xf32, #tpu.memory_space<vmem>>) attributes {dimension_semantics = [#tpu.dimension_semantics<parallel>], iteration_bounds = array<i64: 1>, scalar_prefetch = 0 : i64, scratch_operands = 0 : i64, tpu.core_type = #tpu.core_type<tc>, window_params = [{transform_indices = @transform_0, window_bounds = array<i64: 8, 128>}, {transform_indices = @transform_1, window_bounds = array<i64: 8, 128>}, {pipeline_mode = #tpu.pipeline_mode<synchronous>, transform_indices = @transform_2, window_bounds = array<i64: 128, 384>}, {pipeline_mode = #tpu.pipeline_mode<synchronous>, transform_indices = @transform_3, window_bounds = array<i64: 128, 256>}, {pipeline_mode = #tpu.pipeline_mode<synchronous>, transform_indices = @transform_4, window_bounds = array<i64: 128, 128>}, {pipeline_mode = #tpu.pipeline_mode<synchronous>, transform_indices = @transform_5, window_bounds = array<i64: 1, 384>}, {transform_indices = @transform_6, window_bounds = array<i64: 8, 128>}]} {
    %c0 = arith.constant 0 : index
    %c0_0 = arith.constant 0 : index
    %0 = vector.load %arg6[%c0, %c0_0] : memref<1x384xf32, #tpu.memory_space<vmem>>, vector<1x384xf32>
    %c0_1 = arith.constant 0 : index
    %c0_2 = arith.constant 0 : index
    %1 = vector.load %arg1[%c0_1, %c0_2] : memref<8x128xf32, #tpu.memory_space<vmem>>, vector<8x128xf32>
    %c0_3 = arith.constant 0 : index
    %c0_4 = arith.constant 0 : index
    %2 = vector.load %arg2[%c0_3, %c0_4] : memref<8x128xf32, #tpu.memory_space<vmem>>, vector<8x128xf32>
    %c0_5 = arith.constant 0 : index
    %c0_6 = arith.constant 0 : index
    %3 = vector.load %arg3[%c0_5, %c0_6] : memref<128x384xf32, #tpu.memory_space<vmem>>, vector<128x384xf32>
    %cst = arith.constant dense<0.000000e+00> : vector<8x384xf32>
    %4 = tpu.matmul %1, %3, %cst {dimension_numbers = #tpu.dot_dimension_numbers<[1], [0], [0], [1], [0, 0, 1, 1], [], []>} : vector<8x128xf32>, vector<128x384xf32>, vector<8x384xf32> -> vector<8x384xf32>
    %5 = vector.broadcast %0 : vector<1x384xf32> to vector<8x384xf32>
    %6 = arith.addf %4, %5 : vector<8x384xf32>
    %c0_7 = arith.constant 0 : index
    %c0_8 = arith.constant 0 : index
    %7 = vector.load %arg4[%c0_7, %c0_8] : memref<128x256xf32, #tpu.memory_space<vmem>>, vector<128x256xf32>
    %cst_9 = arith.constant dense<0.000000e+00> : vector<8x256xf32>
    %8 = tpu.matmul %2, %7, %cst_9 {dimension_numbers = #tpu.dot_dimension_numbers<[1], [0], [0], [1], [0, 0, 1, 1], [], []>} : vector<8x128xf32>, vector<128x256xf32>, vector<8x256xf32> -> vector<8x256xf32>
    %9 = vector.extract_strided_slice %6 {offsets = [0, 0], sizes = [8, 128], strides = [1, 1]} : vector<8x384xf32> to vector<8x128xf32>
    %10 = vector.extract_strided_slice %8 {offsets = [0, 0], sizes = [8, 128], strides = [1, 1]} : vector<8x256xf32> to vector<8x128xf32>
    %11 = arith.addf %9, %10 : vector<8x128xf32>
    %12 = arith.negf %11 : vector<8x128xf32>
    %13 = math.exp %12 : vector<8x128xf32>
    %cst_10 = arith.constant 1.000000e+00 : f32
    %14 = vector.broadcast %cst_10 : f32 to vector<8x128xf32>
    %15 = arith.addf %14, %13 : vector<8x128xf32>
    %16 = arith.divf %14, %15 : vector<8x128xf32>
    %17 = vector.extract_strided_slice %6 {offsets = [0, 128], sizes = [8, 128], strides = [1, 1]} : vector<8x384xf32> to vector<8x128xf32>
    %18 = vector.extract_strided_slice %8 {offsets = [0, 128], sizes = [8, 128], strides = [1, 1]} : vector<8x256xf32> to vector<8x128xf32>
    %19 = arith.addf %17, %18 : vector<8x128xf32>
    %20 = arith.negf %19 : vector<8x128xf32>
    %21 = math.exp %20 : vector<8x128xf32>
    %cst_11 = arith.constant 1.000000e+00 : f32
    %22 = vector.broadcast %cst_11 : f32 to vector<8x128xf32>
    %23 = arith.addf %22, %21 : vector<8x128xf32>
    %24 = arith.divf %22, %23 : vector<8x128xf32>
    %25 = arith.mulf %2, %24 : vector<8x128xf32>
    %26 = vector.extract_strided_slice %6 {offsets = [0, 256], sizes = [8, 128], strides = [1, 1]} : vector<8x384xf32> to vector<8x128xf32>
    %c0_12 = arith.constant 0 : index
    %c0_13 = arith.constant 0 : index
    %27 = vector.load %arg5[%c0_12, %c0_13] : memref<128x128xf32, #tpu.memory_space<vmem>>, vector<128x128xf32>
    %cst_14 = arith.constant dense<0.000000e+00> : vector<8x128xf32>
    %28 = tpu.matmul %25, %27, %cst_14 {dimension_numbers = #tpu.dot_dimension_numbers<[1], [0], [0], [1], [0, 0, 1, 1], [], []>} : vector<8x128xf32>, vector<128x128xf32>, vector<8x128xf32> -> vector<8x128xf32>
    %29 = arith.addf %26, %28 : vector<8x128xf32>
    %30 = math.tanh %29 : vector<8x128xf32>
    %31 = arith.subf %30, %2 : vector<8x128xf32>
    %32 = arith.mulf %16, %31 : vector<8x128xf32>
    %33 = arith.addf %2, %32 : vector<8x128xf32>
    %c0_15 = arith.constant 0 : index
    %c0_16 = arith.constant 0 : index
    %34 = vector.load %arg7[%c0_15, %c0_16] : memref<8x128xf32, #tpu.memory_space<vmem>>, vector<8x128xf32>
    tpu.vector_store %arg7[%c0_15, %c0_16], %33 {strides = array<i32>} : memref<8x128xf32, #tpu.memory_space<vmem>>, vector<8x128xf32>,
    return
  }
  func.func @transform_0(%arg0: i32) -> (i32, i32) {
    %c0_i32 = arith.constant 0 : i32
    %c0_i32_0 = arith.constant 0 : i32
    return %arg0, %c0_i32 : i32, i32
  }
  func.func @transform_1(%arg0: i32) -> (i32, i32) {
    %c0_i32 = arith.constant 0 : i32
    %c0_i32_0 = arith.constant 0 : i32
    return %arg0, %c0_i32 : i32, i32
  }
  func.func @transform_2(%arg0: i32) -> (i32, i32) {
    %c0_i32 = arith.constant 0 : i32
    %c0_i32_0 = arith.constant 0 : i32
    %c0_i32_1 = arith.constant 0 : i32
    return %c0_i32, %c0_i32_0 : i32, i32
  }
  func.func @transform_3(%arg0: i32) -> (i32, i32) {
    %c0_i32 = arith.constant 0 : i32
    %c0_i32_0 = arith.constant 0 : i32
    %c0_i32_1 = arith.constant 0 : i32
    return %c0_i32, %c0_i32_0 : i32, i32
  }
  func.func @transform_4(%arg0: i32) -> (i32, i32) {
    %c0_i32 = arith.constant 0 : i32
    %c0_i32_0 = arith.constant 0 : i32
    %c0_i32_1 = arith.constant 0 : i32
    return %c0_i32, %c0_i32_0 : i32, i32
  }
  func.func @transform_5(%arg0: i32) -> (i32, i32) {
    %c0_i32 = arith.constant 0 : i32
    %c0_i32_0 = arith.constant 0 : i32
    %c0_i32_1 = arith.constant 0 : i32
    return %c0_i32, %c0_i32_0 : i32, i32
  }
  func.func @transform_6(%arg0: i32) -> (i32, i32) {
    %c0_i32 = arith.constant 0 : i32
    %c0_i32_0 = arith.constant 0 : i32
    return %arg0, %c0_i32 : i32, i32
  }
}

</mosaic_0001>

<llo_original>
// kernel: tpu_custom_call.1
$region0: #{tpu_custom_call.1}
  #allocation0 [shape = 'u32[]', space=smem, size = 0x4, offset = 0x4, fixed_abs, tag = 'smem constant byte address 0x4 - core index']
  #allocation1 [shape = 'u32[144,128]{1,0:T(1,128)}', space=vmem, size = 0x12000, scoped, tag = 'internal scratch']
  %s0 = inlined_call_operand.hbm [shape: f32[8,128], index: 0, kind: input, shape index: {}]
  %s1 = inlined_call_operand.hbm [shape: f32[8,128], index: 1, kind: input, shape index: {}]
  %s2 = inlined_call_operand.hbm [shape: f32[128,384], index: 2, kind: input, shape index: {}]
  %s3 = inlined_call_operand.hbm [shape: f32[128,256], index: 3, kind: input, shape index: {}]
  %s4 = inlined_call_operand.hbm [shape: f32[128,128], index: 4, kind: input, shape index: {}]
  %s5 = inlined_call_operand.vmem [shape: f32[1,384], index: 5, kind: input, shape index: {}]
  %s6 = inlined_call_operand.hbm [shape: f32[8,128], index: 6, kind: output, shape index: {}]
  %s7 = sld [smem:[#allocation0]]
  $region54: #{tpu_custom_call.1} parent=0
    _
  %s9 = ssub.s32 1, %s7
  %s10 = scalar_select 0, %s9, %s7
  $region1: #{tpu_custom_call.1} parent=0
    #allocation2 [shape = 'u8[4096]{0}', space=vmem, size = 0x1000, scoped, tag = 'input window, operand 0, single buffered']
    #allocation3 [shape = 's32[1]{0}', space=sflag, size = 0x4, scoped, tag = 'scoped memory for tpu_custom_call.1']
    #allocation4 [shape = 's32[1]{0}', space=sflag, size = 0x4, scoped, tag = 'scoped memory for tpu_custom_call.1']
    #allocation5 [shape = 'u8[4096]{0}', space=vmem, size = 0x1000, scoped, tag = 'input window, operand 1, single buffered']
    #allocation6 [shape = 's32[1]{0}', space=sflag, size = 0x4, scoped, tag = 'scoped memory for tpu_custom_call.1']
    #allocation7 [shape = 'u8[196608]{0}', space=vmem, size = 0x30000, scoped, tag = 'input window, operand 2, single buffered']
    #allocation8 [shape = 'u8[131072]{0}', space=vmem, size = 0x20000, scoped, tag = 'input window, operand 3, single buffered']
    #allocation9 [shape = 's32[1]{0}', space=sflag, size = 0x4, scoped, tag = 'scoped memory for tpu_custom_call.1']
    #allocation10 [shape = 'u8[65536]{0}', space=vmem, size = 0x10000, scoped, tag = 'input window, operand 4, single buffered']
    #allocation11 [shape = 'u8[4096]{0}', space=vmem, size = 0x1000, scoped, tag = 'output window, operand 0, single buffered']
    %11 = vsyncpa [#allocation3], 0
    %12 = vsyncpa [#allocation6], 0
    %13 = vsyncpa [#allocation9], 0
    %14 = vsyncpa [#allocation4], 0
    // Predicated region
    $region2: #{tpu_custom_call.1} parent=1 // pred_check
      _
    $region3: #{tpu_custom_call.1} parent=1 // pred_check_branch
      %16 = sbr.rel (0) target = $region5
    $region4: #{tpu_custom_call.1} parent=1 // pred_region
      %s18 = ssub.s32 128, 128
      %19 = vsyncadd [#allocation3], %s18
      %s21 = sshll.u32 [#allocation2], 4
      %s22 = int_to_ptr.vmem [resolvable:$true] %s21
      %24 = dma.hbm_to_vmem [thread:$0]  %s0, 128, %s22, [#allocation3]
    $region5: #{tpu_custom_call.1} parent=1 // pred_fallthru
      _
    // Predicated region
    $region6: #{tpu_custom_call.1} parent=1 // pred_check
      _
    $region7: #{tpu_custom_call.1} parent=1 // pred_check_branch
      %26 = sbr.rel (0) target = $region9
    $region8: #{tpu_custom_call.1} parent=1 // pred_region
      %s28 = ssub.s32 128, 128
      %29 = vsyncadd [#allocation6], %s28
      %s31 = sshll.u32 [#allocation5], 4
      %s32 = int_to_ptr.vmem [resolvable:$true] %s31
      %34 = dma.hbm_to_vmem [thread:$0]  %s1, 128, %s32, [#allocation6]
    $region9: #{tpu_custom_call.1} parent=1 // pred_fallthru
      _
    // Predicated region
    $region10: #{tpu_custom_call.1} parent=1 // pred_check
      _
    $region11: #{tpu_custom_call.1} parent=1 // pred_check_branch
      %36 = sbr.rel (0) target = $region13
    $region12: #{tpu_custom_call.1} parent=1 // pred_region
      %s38 = ssub.s32 6144, 6144
      %39 = vsyncadd [#allocation6], %s38
      %s40 = sshll.u32 [#allocation7], 4
      %s41 = int_to_ptr.vmem [resolvable:$true] %s40
      %46 = dma.hbm_to_vmem [thread:$0]  %s2, 6144, %s41, [#allocation6], 384, 384, 24
    $region13: #{tpu_custom_call.1} parent=1 // pred_fallthru
      _
    // Predicated region
    $region14: #{tpu_custom_call.1} parent=1 // pred_check
      _
    $region15: #{tpu_custom_call.1} parent=1 // pred_check_branch
      %48 = sbr.rel (0) target = $region17
    $region16: #{tpu_custom_call.1} parent=1 // pred_region
      %s50 = ssub.s32 4096, 4096
      %51 = vsyncadd [#allocation9], %s50
      %s52 = sshll.u32 [#allocation8], 4
      %s53 = int_to_ptr.vmem [resolvable:$true] %s52
      %58 = dma.hbm_to_vmem [thread:$0]  %s3, 4096, %s53, [#allocation9], 256, 256, 16
    $region17: #{tpu_custom_call.1} parent=1 // pred_fallthru
      _
    // Predicated region
    $region18: #{tpu_custom_call.1} parent=1 // pred_check
      _
    $region19: #{tpu_custom_call.1} parent=1 // pred_check_branch
      %60 = sbr.rel (0) target = $region21
    $region20: #{tpu_custom_call.1} parent=1 // pred_region
      %s62 = ssub.s32 2048, 2048
      %63 = vsyncadd [#allocation9], %s62
      %s64 = sshll.u32 [#allocation10], 4
      %s65 = int_to_ptr.vmem [resolvable:$true] %s64
      %70 = dma.hbm_to_vmem [thread:$0]  %s4, 2048, %s65, [#allocation9], 128, 128, 8
    $region21: #{tpu_custom_call.1} parent=1 // pred_fallthru
      _
    // Predicated region
    $region22: #{tpu_custom_call.1} parent=1 // pred_check
      _
    $region23: #{tpu_custom_call.1} parent=1 // pred_check_branch
      %72 = sbr.rel (0) target = $region25
    $region24: #{tpu_custom_call.1} parent=1 // pred_region
      _
    $region25: #{tpu_custom_call.1} parent=1 // pred_fallthru
      _
    // Predicated region
    $region26: #{tpu_custom_call.1} parent=1 // pred_check
      _
    $region27: #{tpu_custom_call.1} parent=1 // pred_check_branch
      %74 = sbr.rel (0) target = $region29
    $region28: #{tpu_custom_call.1} parent=1 // pred_region
      %75 = dma.done [#allocation3], 128
    $region29: #{tpu_custom_call.1} parent=1 // pred_fallthru
      _
    // Predicated region
    $region30: #{tpu_custom_call.1} parent=1 // pred_check
      _
    $region31: #{tpu_custom_call.1} parent=1 // pred_check_branch
      %77 = sbr.rel (0) target = $region33
    $region32: #{tpu_custom_call.1} parent=1 // pred_region
      %78 = dma.done [#allocation6], 128
    $region33: #{tpu_custom_call.1} parent=1 // pred_fallthru
      _
    // Predicated region
    $region34: #{tpu_custom_call.1} parent=1 // pred_check
      _
    $region35: #{tpu_custom_call.1} parent=1 // pred_check_branch
      %80 = sbr.rel (0) target = $region37
    $region36: #{tpu_custom_call.1} parent=1 // pred_region
      %81 = dma.done [#allocation6], 6144
    $region37: #{tpu_custom_call.1} parent=1 // pred_fallthru
      _
    // Predicated region
    $region38: #{tpu_custom_call.1} parent=1 // pred_check
      _
    $region39: #{tpu_custom_call.1} parent=1 // pred_check_branch
      %83 = sbr.rel (0) target = $region41
    $region40: #{tpu_custom_call.1} parent=1 // pred_region
      %84 = dma.done [#allocation9], 4096
    $region41: #{tpu_custom_call.1} parent=1 // pred_fallthru
      _
    // Predicated region
    $region42: #{tpu_custom_call.1} parent=1 // pred_check
      _
    $region43: #{tpu_custom_call.1} parent=1 // pred_check_branch
      %86 = sbr.rel (0) target = $region45
    $region44: #{tpu_custom_call.1} parent=1 // pred_region
      %87 = dma.done [#allocation9], 2048
    $region45: #{tpu_custom_call.1} parent=1 // pred_fallthru
      _
    %v88 = vld [vmem:[%s5] sm:$0x7]
    %v89 = vld [vmem:[#allocation2] sm:$0xff]
    %v90 = vld [vmem:[#allocation5] sm:$0xff]
    %v91 = vld [vmem:[#allocation7] sm:$0xff]
    %v92 = vld [vmem:[#allocation7 + $0x8] sm:$0xff]
    %v93 = vld [vmem:[#allocation7 + $0x10] sm:$0xff]
    %v94 = vld [vmem:[#allocation7 + $0x18] sm:$0xff]
    %v95 = vld [vmem:[#allocation7 + $0x20] sm:$0xff]
    %v96 = vld [vmem:[#allocation7 + $0x28] sm:$0xff]
    %v97 = vld [vmem:[#allocation7 + $0x30] sm:$0xff]
    %v98 = vld [vmem:[#allocation7 + $0x38] sm:$0xff]
    %v99 = vld [vmem:[#allocation7 + $0x40] sm:$0xff]
    %v100 = vld [vmem:[#allocation7 + $0x48] sm:$0xff]
    %v101 = vld [vmem:[#allocation7 + $0x50] sm:$0xff]
    %v102 = vld [vmem:[#allocation7 + $0x58] sm:$0xff]
    %v103 = vld [vmem:[#allocation7 + $0x60] sm:$0xff]
    %v104 = vld [vmem:[#allocation7 + $0x68] sm:$0xff]
    %v105 = vld [vmem:[#allocation7 + $0x70] sm:$0xff]
    %v106 = vld [vmem:[#allocation7 + $0x78] sm:$0xff]
    %v107 = vld [vmem:[#allocation7 + $0x80] sm:$0xff]
    %v108 = vld [vmem:[#allocation7 + $0x88] sm:$0xff]
    %v109 = vld [vmem:[#allocation7 + $0x90] sm:$0xff]
    %v110 = vld [vmem:[#allocation7 + $0x98] sm:$0xff]
    %v111 = vld [vmem:[#allocation7 + $0xa0] sm:$0xff]
    %v112 = vld [vmem:[#allocation7 + $0xa8] sm:$0xff]
    %v113 = vld [vmem:[#allocation7 + $0xb0] sm:$0xff]
    %v114 = vld [vmem:[#allocation7 + $0xb8] sm:$0xff]
    %v115 = vld [vmem:[#allocation7 + $0xc0] sm:$0xff]
    %v116 = vld [vmem:[#allocation7 + $0xc8] sm:$0xff]
    %v117 = vld [vmem:[#allocation7 + $0xd0] sm:$0xff]
    %v118 = vld [vmem:[#allocation7 + $0xd8] sm:$0xff]
    %v119 = vld [vmem:[#allocation7 + $0xe0] sm:$0xff]
    %v120 = vld [vmem:[#allocation7 + $0xe8] sm:$0xff]
    %v121 = vld [vmem:[#allocation7 + $0xf0] sm:$0xff]
    %v122 = vld [vmem:[#allocation7 + $0xf8] sm:$0xff]
    %v123 = vld [vmem:[#allocation7 + $0x100] sm:$0xff]
    %v124 = vld [vmem:[#allocation7 + $0x108] sm:$0xff]
    %v125 = vld [vmem:[#allocation7 + $0x110] sm:$0xff]
    %v126 = vld [vmem:[#allocation7 + $0x118] sm:$0xff]
    %v127 = vld [vmem:[#allocation7 + $0x120] sm:$0xff]
    %v128 = vld [vmem:[#allocation7 + $0x128] sm:$0xff]
    %v129 = vld [vmem:[#allocation7 + $0x130] sm:$0xff]
    %v130 = vld [vmem:[#allocation7 + $0x138] sm:$0xff]
    %v131 = vld [vmem:[#allocation7 + $0x140] sm:$0xff]
    %v132 = vld [vmem:[#allocation7 + $0x148] sm:$0xff]
    %v133 = vld [vmem:[#allocation7 + $0x150] sm:$0xff]
    %v134 = vld [vmem:[#allocation7 + $0x158] sm:$0xff]
    %v135 = vld [vmem:[#allocation7 + $0x160] sm:$0xff]
    %v136 = vld [vmem:[#allocation7 + $0x168] sm:$0xff]
    %v137 = vld [vmem:[#allocation7 + $0x170] sm:$0xff]
    %v138 = vld [vmem:[#allocation7 + $0x178] sm:$0xff]
    %v140 = vlaneseq
    %v141 = vshrl.u32 %v140, 7
    %v142 = vsub.s32 0, %v141
    %v143 = vrot.slane %v88, %v142
    %v144 = vlaneseq
    %v145 = vshrl.u32 %v144, 7
    %v146 = vsub.s32 1, %v145
    %v147 = vrot.slane %v88, %v146
    %v148 = vlaneseq
    %v149 = vshrl.u32 %v148, 7
    %v150 = vsub.s32 2, %v149
    %v151 = vrot.slane %v88, %v150
    %155 = vmatprep.subr.mxu0 %v137
    %156 = vmatpush1.msra.mxu0 %v136
    %157 = vmatprep.subr.mxu0 %v134
    %158 = vmatpush1.msra.mxu0 %v133
    %159 = vmatprep.subr.mxu0 %v131
    %160 = vmatpush1.msra.mxu0 %v130
    %161 = vmatprep.subr.mxu0 %v128
    %162 = vmatpush1.msra.mxu0 %v127
    %163 = vmatprep.subr.mxu0 %v125
    %164 = vmatpush1.msra.mxu0 %v124
    %165 = vmatprep.subr.mxu0 %v122
    %166 = vmatpush1.msra.mxu0 %v121
    %167 = vmatprep.subr.mxu0 %v119
    %168 = vmatpush1.msra.mxu0 %v118
    %169 = vmatprep.subr.mxu0 %v116
    %170 = vmatpush1.msra.mxu0 %v115
    %171 = vmatprep.subr.mxu0 %v113
    %172 = vmatpush1.msra.mxu0 %v112
    %173 = vmatprep.subr.mxu0 %v110
    %174 = vmatpush1.msra.mxu0 %v109
    %175 = vmatprep.subr.mxu0 %v107
    %176 = vmatpush1.msra.mxu0 %v106
    %177 = vmatprep.subr.mxu0 %v104
    %178 = vmatpush1.msra.mxu0 %v103
    %179 = vmatprep.subr.mxu0 %v101
    %180 = vmatpush1.msra.mxu0 %v100
    %181 = vmatprep.subr.mxu0 %v98
    %182 = vmatpush1.msra.mxu0 %v97
    %183 = vmatprep.subr.mxu0 %v95
    %184 = vmatpush1.msra.mxu0 %v94
    %185 = vmatprep.subr.mxu0 %v92
    %186 = vmatpush1.msra.mxu0 %v91
    %187 = vmatprep.subr.mxu0 0.0
    %188 = vmatpush2.msra.mxu0 0.0
    %189 = vmatprep.subr.mxu0 0.0
    %190 = vmatpush2.msra.mxu0 0.0
    %191 = vmatprep.subr.mxu0 0.0
    %192 = vmatpush2.msra.mxu0 0.0
    %193 = vmatprep.subr.mxu0 0.0
    %194 = vmatpush2.msra.mxu0 0.0
    %195 = vmatprep.subr.mxu0 0.0
    %196 = vmatpush2.msra.mxu0 0.0
    %197 = vmatprep.subr.mxu0 0.0
    %198 = vmatpush2.msra.mxu0 0.0
    %199 = vmatprep.subr.mxu0 0.0
    %200 = vmatpush2.msra.mxu0 0.0
    %201 = vmatprep.subr.mxu0 0.0
    %202 = vmatpush2.msra.mxu0 0.0
    %203 = vmatprep.subr.mxu0 0.0
    %204 = vmatpush2.msra.mxu0 0.0
    %205 = vmatprep.subr.mxu0 0.0
    %206 = vmatpush2.msra.mxu0 0.0
    %207 = vmatprep.subr.mxu0 0.0
    %208 = vmatpush2.msra.mxu0 0.0
    %209 = vmatprep.subr.mxu0 0.0
    %210 = vmatpush2.msra.mxu0 0.0
    %211 = vmatprep.subr.mxu0 0.0
    %212 = vmatpush2.msra.mxu0 0.0
    %213 = vmatprep.subr.mxu0 0.0
    %214 = vmatpush2.msra.mxu0 0.0
    %215 = vmatprep.subr.mxu0 0.0
    %216 = vmatpush2.msra.mxu0 0.0
    %217 = vmatprep.subr.mxu0 0.0
    %218 = vmatpush2.msra.mxu0 0.0
    %219 = vmatprep.mubr.f32.mxu0 0.0
    %220 = vmatmul.mubr.f32.gmra.mxu0 %v89
    %v221 = vpop.f32.mrf.mxu0
    %v222 = vadd.f32 %v143, %v221
    %v223 = vpop.f32.mrf.mxu0
    %v224 = vadd.f32 %v147, %v223
    %225 = vdwg.mxu0
    %226 = vmatprep.subr.mxu0 0.0
    %227 = vmatpush1.msra.mxu0 %v138
    %228 = vmatprep.subr.mxu0 0.0
    %229 = vmatpush1.msra.mxu0 %v135
    %230 = vmatprep.subr.mxu0 0.0
    %231 = vmatpush1.msra.mxu0 %v132
    %232 = vmatprep.subr.mxu0 0.0
    %233 = vmatpush1.msra.mxu0 %v129
    %234 = vmatprep.subr.mxu0 0.0
    %235 = vmatpush1.msra.mxu0 %v126
    %236 = vmatprep.subr.mxu0 0.0
    %237 = vmatpush1.msra.mxu0 %v123
    %238 = vmatprep.subr.mxu0 0.0
    %239 = vmatpush1.msra.mxu0 %v120
    %240 = vmatprep.subr.mxu0 0.0
    %241 = vmatpush1.msra.mxu0 %v117
    %242 = vmatprep.subr.mxu0 0.0
    %243 = vmatpush1.msra.mxu0 %v114
    %244 = vmatprep.subr.mxu0 0.0
    %245 = vmatpush1.msra.mxu0 %v111
    %246 = vmatprep.subr.mxu0 0.0
    %247 = vmatpush1.msra.mxu0 %v108
    %248 = vmatprep.subr.mxu0 0.0
    %249 = vmatpush1.msra.mxu0 %v105
    %250 = vmatprep.subr.mxu0 0.0
    %251 = vmatpush1.msra.mxu0 %v102
    %252 = vmatprep.subr.mxu0 0.0
    %253 = vmatpush1.msra.mxu0 %v99
    %254 = vmatprep.subr.mxu0 0.0
    %255 = vmatpush1.msra.mxu0 %v96
    %256 = vmatprep.subr.mxu0 0.0
    %257 = vmatpush1.msra.mxu0 %v93
    %258 = vmatprep.subr.mxu0 0.0
    %259 = vmatpush2.msra.mxu0 0.0
    %260 = vmatprep.subr.mxu0 0.0
    %261 = vmatpush2.msra.mxu0 0.0
    %262 = vmatprep.subr.mxu0 0.0
    %263 = vmatpush2.msra.mxu0 0.0
    %264 = vmatprep.subr.mxu0 0.0
    %265 = vmatpush2.msra.mxu0 0.0
    %266 = vmatprep.subr.mxu0 0.0
    %267 = vmatpush2.msra.mxu0 0.0
    %268 = vmatprep.subr.mxu0 0.0
    %269 = vmatpush2.msra.mxu0 0.0
    %270 = vmatprep.subr.mxu0 0.0
    %271 = vmatpush2.msra.mxu0 0.0
    %272 = vmatprep.subr.mxu0 0.0
    %273 = vmatpush2.msra.mxu0 0.0
    %274 = vmatprep.subr.mxu0 0.0
    %275 = vmatpush2.msra.mxu0 0.0
    %276 = vmatprep.subr.mxu0 0.0
    %277 = vmatpush2.msra.mxu0 0.0
    %278 = vmatprep.subr.mxu0 0.0
    %279 = vmatpush2.msra.mxu0 0.0
    %280 = vmatprep.subr.mxu0 0.0
    %281 = vmatpush2.msra.mxu0 0.0
    %282 = vmatprep.subr.mxu0 0.0
    %283 = vmatpush2.msra.mxu0 0.0
    %284 = vmatprep.subr.mxu0 0.0
    %285 = vmatpush2.msra.mxu0 0.0
    %286 = vmatprep.subr.mxu0 0.0
    %287 = vmatpush2.msra.mxu0 0.0
    %288 = vmatprep.subr.mxu0 0.0
    %289 = vmatpush2.msra.mxu0 0.0
    %290 = vmatprep.mubr.f32.mxu0 0.0
    %291 = vmatmul.mubr.f32.gmra.mxu0 %v89
    %v292 = vpop.f32.mrf.mxu0
    %v293 = vadd.f32 %v151, %v292
    %v294 = vpop.f32.mrf.mxu0
    %295 = vdwg.mxu0
    %v296 = vld [vmem:[#allocation8] sm:$0xff]
    %v297 = vld [vmem:[#allocation8 + $0x8] sm:$0xff]
    %v298 = vld [vmem:[#allocation8 + $0x10] sm:$0xff]
    %v299 = vld [vmem:[#allocation8 + $0x18] sm:$0xff]
    %v300 = vld [vmem:[#allocation8 + $0x20] sm:$0xff]
    %v301 = vld [vmem:[#allocation8 + $0x28] sm:$0xff]
    %v302 = vld [vmem:[#allocation8 + $0x30] sm:$0xff]
    %v303 = vld [vmem:[#allocation8 + $0x38] sm:$0xff]
    %v304 = vld [vmem:[#allocation8 + $0x40] sm:$0xff]
    %v305 = vld [vmem:[#allocation8 + $0x48] sm:$0xff]
    %v306 = vld [vmem:[#allocation8 + $0x50] sm:$0xff]
    %v307 = vld [vmem:[#allocation8 + $0x58] sm:$0xff]
    %v308 = vld [vmem:[#allocation8 + $0x60] sm:$0xff]
    %v309 = vld [vmem:[#allocation8 + $0x68] sm:$0xff]
    %v310 = vld [vmem:[#allocation8 + $0x70] sm:$0xff]
    %v311 = vld [vmem:[#allocation8 + $0x78] sm:$0xff]
    %v312 = vld [vmem:[#allocation8 + $0x80] sm:$0xff]
    %v313 = vld [vmem:[#allocation8 + $0x88] sm:$0xff]
    %v314 = vld [vmem:[#allocation8 + $0x90] sm:$0xff]
    %v315 = vld [vmem:[#allocation8 + $0x98] sm:$0xff]
    %v316 = vld [vmem:[#allocation8 + $0xa0] sm:$0xff]
    %v317 = vld [vmem:[#allocation8 + $0xa8] sm:$0xff]
    %v318 = vld [vmem:[#allocation8 + $0xb0] sm:$0xff]
    %v319 = vld [vmem:[#allocation8 + $0xb8] sm:$0xff]
    %v320 = vld [vmem:[#allocation8 + $0xc0] sm:$0xff]
    %v321 = vld [vmem:[#allocation8 + $0xc8] sm:$0xff]
    %v322 = vld [vmem:[#allocation8 + $0xd0] sm:$0xff]
    %v323 = vld [vmem:[#allocation8 + $0xd8] sm:$0xff]
    %v324 = vld [vmem:[#allocation8 + $0xe0] sm:$0xff]
    %v325 = vld [vmem:[#allocation8 + $0xe8] sm:$0xff]
    %v326 = vld [vmem:[#allocation8 + $0xf0] sm:$0xff]
    %v327 = vld [vmem:[#allocation8 + $0xf8] sm:$0xff]
    %328 = vmatprep.subr.mxu0 %v327
    %329 = vmatpush1.msra.mxu0 %v326
    %330 = vmatprep.subr.mxu0 %v325
    %331 = vmatpush1.msra.mxu0 %v324
    %332 = vmatprep.subr.mxu0 %v323
    %333 = vmatpush1.msra.mxu0 %v322
    %334 = vmatprep.subr.mxu0 %v321
    %335 = vmatpush1.msra.mxu0 %v320
    %336 = vmatprep.subr.mxu0 %v319
    %337 = vmatpush1.msra.mxu0 %v318
    %338 = vmatprep.subr.mxu0 %v317
    %339 = vmatpush1.msra.mxu0 %v316
    %340 = vmatprep.subr.mxu0 %v315
    %341 = vmatpush1.msra.mxu0 %v314
    %342 = vmatprep.subr.mxu0 %v313
    %343 = vmatpush1.msra.mxu0 %v312
    %344 = vmatprep.subr.mxu0 %v311
    %345 = vmatpush1.msra.mxu0 %v310
    %346 = vmatprep.subr.mxu0 %v309
    %347 = vmatpush1.msra.mxu0 %v308
    %348 = vmatprep.subr.mxu0 %v307
    %349 = vmatpush1.msra.mxu0 %v306
    %350 = vmatprep.subr.mxu0 %v305
    %351 = vmatpush1.msra.mxu0 %v304
    %352 = vmatprep.subr.mxu0 %v303
    %353 = vmatpush1.msra.mxu0 %v302
    %354 = vmatprep.subr.mxu0 %v301
    %355 = vmatpush1.msra.mxu0 %v300
    %356 = vmatprep.subr.mxu0 %v299
    %357 = vmatpush1.msra.mxu0 %v298
    %358 = vmatprep.subr.mxu0 %v297
    %359 = vmatpush1.msra.mxu0 %v296
    %360 = vmatprep.subr.mxu0 0.0
    %361 = vmatpush2.msra.mxu0 0.0
    %362 = vmatprep.subr.mxu0 0.0
    %363 = vmatpush2.msra.mxu0 0.0
    %364 = vmatprep.subr.mxu0 0.0
    %365 = vmatpush2.msra.mxu0 0.0
    %366 = vmatprep.subr.mxu0 0.0
    %367 = vmatpush2.msra.mxu0 0.0
    %368 = vmatprep.subr.mxu0 0.0
    %369 = vmatpush2.msra.mxu0 0.0
    %370 = vmatprep.subr.mxu0 0.0
    %371 = vmatpush2.msra.mxu0 0.0
    %372 = vmatprep.subr.mxu0 0.0
    %373 = vmatpush2.msra.mxu0 0.0
    %374 = vmatprep.subr.mxu0 0.0
    %375 = vmatpush2.msra.mxu0 0.0
    %376 = vmatprep.subr.mxu0 0.0
    %377 = vmatpush2.msra.mxu0 0.0
    %378 = vmatprep.subr.mxu0 0.0
    %379 = vmatpush2.msra.mxu0 0.0
    %380 = vmatprep.subr.mxu0 0.0
    %381 = vmatpush2.msra.mxu0 0.0
    %382 = vmatprep.subr.mxu0 0.0
    %383 = vmatpush2.msra.mxu0 0.0
    %384 = vmatprep.subr.mxu0 0.0
    %385 = vmatpush2.msra.mxu0 0.0
    %386 = vmatprep.subr.mxu0 0.0
    %387 = vmatpush2.msra.mxu0 0.0
    %388 = vmatprep.subr.mxu0 0.0
    %389 = vmatpush2.msra.mxu0 0.0
    %390 = vmatprep.subr.mxu0 0.0
    %391 = vmatpush2.msra.mxu0 0.0
    %392 = vmatprep.mubr.f32.mxu0 0.0
    %393 = vmatmul.mubr.f32.gmra.mxu0 %v90
    %v394 = vpop.f32.mrf.mxu0
    %v395 = vadd.f32 0.0, %v394
    %v396 = vpop.f32.mrf.mxu0
    %v397 = vadd.f32 0.0, %v396
    %398 = vdwg.mxu0
    %v399 = vadd.f32 %v222, %v395
    %v400 = vxor.u32 %v399, 2147483648
    %v401 = vmul.f32 %v400, 1.442695
    %v402 = vpow.pop %v401
    %v403 = vadd.f32 %v402, 1.0
    %v404 = vrcp.pop %v403
    %v405 = vmul.f32 1.0, %v404
    %v406 = vadd.f32 %v224, %v397
    %v407 = vxor.u32 %v406, 2147483648
    %v408 = vmul.f32 %v407, 1.442695
    %v409 = vpow.pop %v408
    %v410 = vadd.f32 %v409, 1.0
    %v411 = vrcp.pop %v410
    %v412 = vmul.f32 1.0, %v411
    %v413 = vmul.f32 %v90, %v412
    %v414 = vld [vmem:[#allocation10] sm:$0xff]
    %v415 = vld [vmem:[#allocation10 + $0x8] sm:$0xff]
    %v416 = vld [vmem:[#allocation10 + $0x10] sm:$0xff]
    %v417 = vld [vmem:[#allocation10 + $0x18] sm:$0xff]
    %v418 = vld [vmem:[#allocation10 + $0x20] sm:$0xff]
    %v419 = vld [vmem:[#allocation10 + $0x28] sm:$0xff]
    %v420 = vld [vmem:[#allocation10 + $0x30] sm:$0xff]
    %v421 = vld [vmem:[#allocation10 + $0x38] sm:$0xff]
    %v422 = vld [vmem:[#allocation10 + $0x40] sm:$0xff]
    %v423 = vld [vmem:[#allocation10 + $0x48] sm:$0xff]
    %v424 = vld [vmem:[#allocation10 + $0x50] sm:$0xff]
    %v425 = vld [vmem:[#allocation10 + $0x58] sm:$0xff]
    %v426 = vld [vmem:[#allocation10 + $0x60] sm:$0xff]
    %v427 = vld [vmem:[#allocation10 + $0x68] sm:$0xff]
    %v428 = vld [vmem:[#allocation10 + $0x70] sm:$0xff]
    %v429 = vld [vmem:[#allocation10 + $0x78] sm:$0xff]
    %430 = vmatprep.subr.mxu0 0.0
    %431 = vmatpush1.msra.mxu0 %v429
    %432 = vmatprep.subr.mxu0 0.0
    %433 = vmatpush1.msra.mxu0 %v428
    %434 = vmatprep.subr.mxu0 0.0
    %435 = vmatpush1.msra.mxu0 %v427
    %436 = vmatprep.subr.mxu0 0.0
    %437 = vmatpush1.msra.mxu0 %v426
    %438 = vmatprep.subr.mxu0 0.0
    %439 = vmatpush1.msra.mxu0 %v425
    %440 = vmatprep.subr.mxu0 0.0
    %441 = vmatpush1.msra.mxu0 %v424
    %442 = vmatprep.subr.mxu0 0.0
    %443 = vmatpush1.msra.mxu0 %v423
    %444 = vmatprep.subr.mxu0 0.0
    %445 = vmatpush1.msra.mxu0 %v422
    %446 = vmatprep.subr.mxu0 0.0
    %447 = vmatpush1.msra.mxu0 %v421
    %448 = vmatprep.subr.mxu0 0.0
    %449 = vmatpush1.msra.mxu0 %v420
    %450 = vmatprep.subr.mxu0 0.0
    %451 = vmatpush1.msra.mxu0 %v419
    %452 = vmatprep.subr.mxu0 0.0
    %453 = vmatpush1.msra.mxu0 %v418
    %454 = vmatprep.subr.mxu0 0.0
    %455 = vmatpush1.msra.mxu0 %v417
    %456 = vmatprep.subr.mxu0 0.0
    %457 = vmatpush1.msra.mxu0 %v416
    %458 = vmatprep.subr.mxu0 0.0
    %459 = vmatpush1.msra.mxu0 %v415
    %460 = vmatprep.subr.mxu0 0.0
    %461 = vmatpush1.msra.mxu0 %v414
    %462 = vmatprep.subr.mxu0 0.0
    %463 = vmatpush2.msra.mxu0 0.0
    %464 = vmatprep.subr.mxu0 0.0
    %465 = vmatpush2.msra.mxu0 0.0
    %466 = vmatprep.subr.mxu0 0.0
    %467 = vmatpush2.msra.mxu0 0.0
    %468 = vmatprep.subr.mxu0 0.0
    %469 = vmatpush2.msra.mxu0 0.0
    %470 = vmatprep.subr.mxu0 0.0
    %471 = vmatpush2.msra.mxu0 0.0
    %472 = vmatprep.subr.mxu0 0.0
    %473 = vmatpush2.msra.mxu0 0.0
    %474 = vmatprep.subr.mxu0 0.0
    %475 = vmatpush2.msra.mxu0 0.0
    %476 = vmatprep.subr.mxu0 0.0
    %477 = vmatpush2.msra.mxu0 0.0
    %478 = vmatprep.subr.mxu0 0.0
    %479 = vmatpush2.msra.mxu0 0.0
    %480 = vmatprep.subr.mxu0 0.0
    %481 = vmatpush2.msra.mxu0 0.0
    %482 = vmatprep.subr.mxu0 0.0
    %483 = vmatpush2.msra.mxu0 0.0
    %484 = vmatprep.subr.mxu0 0.0
    %485 = vmatpush2.msra.mxu0 0.0
    %486 = vmatprep.subr.mxu0 0.0
    %487 = vmatpush2.msra.mxu0 0.0
    %488 = vmatprep.subr.mxu0 0.0
    %489 = vmatpush2.msra.mxu0 0.0
    %490 = vmatprep.subr.mxu0 0.0
    %491 = vmatpush2.msra.mxu0 0.0
    %492 = vmatprep.subr.mxu0 0.0
    %493 = vmatpush2.msra.mxu0 0.0
    %494 = vmatprep.mubr.f32.mxu0 0.0
    %495 = vmatmul.mubr.f32.gmra.mxu0 %v413
    %v496 = vpop.f32.mrf.mxu0
    %v497 = vadd.f32 0.0, %v496
    %v498 = vpop.f32.mrf.mxu0
    %499 = vdwg.mxu0
    %v500 = vadd.f32 %v293, %v497
    %v501 = vtanh.pop %v500
    %v502 = vsub.f32 %v501, %v90
    %v503 = vmul.f32 %v405, %v502
    %v504 = vadd.f32 %v90, %v503
    %505 = vst [vmem:[#allocation11] sm:$0xff] %v504
    // Predicated region
    $region46: #{tpu_custom_call.1} parent=1 // pred_check
      _
    $region47: #{tpu_custom_call.1} parent=1 // pred_check_branch
      %507 = sbr.rel (0) target = $region49
    $region48: #{tpu_custom_call.1} parent=1 // pred_region
      %s509 = ssub.s32 128, 128
      %510 = vsyncadd [#allocation4], %s509
      %s512 = sshll.u32 [#allocation11], 4
      %s513 = int_to_ptr.vmem [resolvable:$true] %s512
      %515 = dma.vmem_to_hbm [thread:$0]  %s513, 128, %s6, [#allocation4]
    $region49: #{tpu_custom_call.1} parent=1 // pred_fallthru
      _
    // Predicated region
    $region50: #{tpu_custom_call.1} parent=1 // pred_check
      _
    $region51: #{tpu_custom_call.1} parent=1 // pred_check_branch
      %517 = sbr.rel (0) target = $region53
    $region52: #{tpu_custom_call.1} parent=1 // pred_region
      %518 = dma.done [#allocation4], 128
    $region53: #{tpu_custom_call.1} parent=1 // pred_fallthru
      _
    %519 = vsyncpa [#allocation3], 1
    %520 = vsyncpa [#allocation6], 1
    %521 = vsyncpa [#allocation9], 1
    %522 = vsyncpa [#allocation4], 1

// kernel: tpu_custom_call.1
$region0: #{tpu_custom_call.1}
  #allocation0 [shape = 'u32[]', space=smem, size = 0x4, offset = 0x4, fixed_abs, tag = 'smem constant byte address 0x4 - core index']
  #allocation1 [shape = 'u32[144,128]{1,0:T(1,128)}', space=vmem, size = 0x12000, scoped, tag = 'internal scratch']
  %s0 = inlined_call_operand.hbm [shape: f32[8,128], index: 0, kind: input, shape index: {}]
  %s1 = inlined_call_operand.hbm [shape: f32[8,128], index: 1, kind: input, shape index: {}]
  %s2 = inlined_call_operand.hbm [shape: f32[128,384], index: 2, kind: input, shape index: {}]
  %s3 = inlined_call_operand.hbm [shape: f32[128,256], index: 3, kind: input, shape index: {}]
  %s4 = inlined_call_operand.hbm [shape: f32[128,128], index: 4, kind: input, shape index: {}]
  %s5 = inlined_call_operand.vmem [shape: f32[1,384], index: 5, kind: input, shape index: {}]
  %s6 = inlined_call_operand.hbm [shape: f32[8,128], index: 6, kind: output, shape index: {}]
  %s7 = sld [smem:[#allocation0]]
  $region54: #{tpu_custom_call.1} parent=0
    _
  %s9 = ssub.s32 1, %s7
  %s10 = scalar_select 0, %s9, %s7
  $region1: #{tpu_custom_call.1} parent=0
    #allocation2 [shape = 'u8[4096]{0}', space=vmem, size = 0x1000, scoped, tag = 'input window, operand 0, single buffered']
    #allocation3 [shape = 's32[1]{0}', space=sflag, size = 0x4, scoped, tag = 'scoped memory for tpu_custom_call.1']
    #allocation4 [shape = 's32[1]{0}', space=sflag, size = 0x4, scoped, tag = 'scoped memory for tpu_custom_call.1']
    #allocation5 [shape = 'u8[4096]{0}', space=vmem, size = 0x1000, scoped, tag = 'input window, operand 1, single buffered']
    #allocation6 [shape = 's32[1]{0}', space=sflag, size = 0x4, scoped, tag = 'scoped memory for tpu_custom_call.1']
    #allocation7 [shape = 'u8[196608]{0}', space=vmem, size = 0x30000, scoped, tag = 'input window, operand 2, single buffered']
    #allocation8 [shape = 'u8[131072]{0}', space=vmem, size = 0x20000, scoped, tag = 'input window, operand 3, single buffered']
    #allocation9 [shape = 's32[1]{0}', space=sflag, size = 0x4, scoped, tag = 'scoped memory for tpu_custom_call.1']
    #allocation10 [shape = 'u8[65536]{0}', space=vmem, size = 0x10000, scoped, tag = 'input window, operand 4, single buffered']
    #allocation11 [shape = 'u8[4096]{0}', space=vmem, size = 0x1000, scoped, tag = 'output window, operand 0, single buffered']
    %11 = vsyncpa [#allocation3], 0
    %12 = vsyncpa [#allocation6], 0
    %13 = vsyncpa [#allocation9], 0
    %14 = vsyncpa [#allocation4], 0
    // Predicated region
    $region2: #{tpu_custom_call.1} parent=1 // pred_check
      _
    $region3: #{tpu_custom_call.1} parent=1 // pred_check_branch
      %16 = sbr.rel (0) target = $region5
    $region4: #{tpu_custom_call.1} parent=1 // pred_region
      %s18 = ssub.s32 128, 128
      %19 = vsyncadd [#allocation3], %s18
      %s21 = sshll.u32 [#allocation2], 4
      %s22 = int_to_ptr.vmem [resolvable:$true] %s21
      %24 = dma.hbm_to_vmem [thread:$0]  %s0, 128, %s22, [#allocation3]
    $region5: #{tpu_custom_call.1} parent=1 // pred_fallthru
      _
    // Predicated region
    $region6: #{tpu_custom_call.1} parent=1 // pred_check
      _
    $region7: #{tpu_custom_call.1} parent=1 // pred_check_branch
      %26 = sbr.rel (0) target = $region9
    $region8: #{tpu_custom_call.1} parent=1 // pred_region
      %s28 = ssub.s32 128, 128
      %29 = vsyncadd [#allocation6], %s28
      %s31 = sshll.u32 [#allocation5], 4
      %s32 = int_to_ptr.vmem [resolvable:$true] %s31
      %34 = dma.hbm_to_vmem [thread:$0]  %s1, 128, %s32, [#allocation6]
    $region9: #{tpu_custom_call.1} parent=1 // pred_fallthru
      _
    // Predicated region
    $region10: #{tpu_custom_call.1} parent=1 // pred_check
      _
    $region11: #{tpu_custom_call.1} parent=1 // pred_check_branch
      %36 = sbr.rel (0) target = $region13
    $region12: #{tpu_custom_call.1} parent=1 // pred_region
      %s38 = ssub.s32 6144, 6144
      %39 = vsyncadd [#allocation6], %s38
      %s40 = sshll.u32 [#allocation7], 4
      %s41 = int_to_ptr.vmem [resolvable:$true] %s40
      %46 = dma.hbm_to_vmem [thread:$0]  %s2, 6144, %s41, [#allocation6], 384, 384, 24
    $region13: #{tpu_custom_call.1} parent=1 // pred_fallthru
      _
    // Predicated region
    $region14: #{tpu_custom_call.1} parent=1 // pred_check
      _
    $region15: #{tpu_custom_call.1} parent=1 // pred_check_branch
      %48 = sbr.rel (0) target = $region17
    $region16: #{tpu_custom_call.1} parent=1 // pred_region
      %s50 = ssub.s32 4096, 4096
      %51 = vsyncadd [#allocation9], %s50
      %s52 = sshll.u32 [#allocation8], 4
      %s53 = int_to_ptr.vmem [resolvable:$true] %s52
      %58 = dma.hbm_to_vmem [thread:$0]  %s3, 4096, %s53, [#allocation9], 256, 256, 16
    $region17: #{tpu_custom_call.1} parent=1 // pred_fallthru
      _
    // Predicated region
    $region18: #{tpu_custom_call.1} parent=1 // pred_check
      _
    $region19: #{tpu_custom_call.1} parent=1 // pred_check_branch
      %60 = sbr.rel (0) target = $region21
    $region20: #{tpu_custom_call.1} parent=1 // pred_region
      %s62 = ssub.s32 2048, 2048
      %63 = vsyncadd [#allocation9], %s62
      %s64 = sshll.u32 [#allocation10], 4
      %s65 = int_to_ptr.vmem [resolvable:$true] %s64
      %70 = dma.hbm_to_vmem [thread:$0]  %s4, 2048, %s65, [#allocation9], 128, 128, 8
    $region21: #{tpu_custom_call.1} parent=1 // pred_fallthru
      _
    // Predicated region
    $region22: #{tpu_custom_call.1} parent=1 // pred_check
      _
    $region23: #{tpu_custom_call.1} parent=1 // pred_check_branch
      %72 = sbr.rel (0) target = $region25
    $region24: #{tpu_custom_call.1} parent=1 // pred_region
      _
    $region25: #{tpu_custom_call.1} parent=1 // pred_fallthru
      _
    // Predicated region
    $region26: #{tpu_custom_call.1} parent=1 // pred_check
      _
    $region27: #{tpu_custom_call.1} parent=1 // pred_check_branch
      %74 = sbr.rel (0) target = $region29
    $region28: #{tpu_custom_call.1} parent=1 // pred_region
      %75 = dma.done [#allocation3], 128
    $region29: #{tpu_custom_call.1} parent=1 // pred_fallthru
      _
    // Predicated region
    $region30: #{tpu_custom_call.1} parent=1 // pred_check
      _
    $region31: #{tpu_custom_call.1} parent=1 // pred_check_branch
      %77 = sbr.rel (0) target = $region33
    $region32: #{tpu_custom_call.1} parent=1 // pred_region
      %78 = dma.done [#allocation6], 128
    $region33: #{tpu_custom_call.1} parent=1 // pred_fallthru
      _
    // Predicated region
    $region34: #{tpu_custom_call.1} parent=1 // pred_check
      _
    $region35: #{tpu_custom_call.1} parent=1 // pred_check_branch
      %80 = sbr.rel (0) target = $region37
    $region36: #{tpu_custom_call.1} parent=1 // pred_region
      %81 = dma.done [#allocation6], 6144
    $region37: #{tpu_custom_call.1} parent=1 // pred_fallthru
      _
    // Predicated region
    $region38: #{tpu_custom_call.1} parent=1 // pred_check
      _
    $region39: #{tpu_custom_call.1} parent=1 // pred_check_branch
      %83 = sbr.rel (0) target = $region41
    $region40: #{tpu_custom_call.1} parent=1 // pred_region
      %84 = dma.done [#allocation9], 4096
    $region41: #{tpu_custom_call.1} parent=1 // pred_fallthru
      _
    // Predicated region
    $region42: #{tpu_custom_call.1} parent=1 // pred_check
      _
    $region43: #{tpu_custom_call.1} parent=1 // pred_check_branch
      %86 = sbr.rel (0) target = $region45
    $region44: #{tpu_custom_call.1} parent=1 // pred_region
      %87 = dma.done [#allocation9], 2048
    $region45: #{tpu_custom_call.1} parent=1 // pred_fallthru
      _
    %v88 = vld [vmem:[%s5] sm:$0x7]
    %v89 = vld [vmem:[#allocation2] sm:$0xff]
    %v90 = vld [vmem:[#allocation5] sm:$0xff]
    %v91 = vld [vmem:[#allocation7] sm:$0xff]
    %v92 = vld [vmem:[#allocation7 + $0x8] sm:$0xff]
    %v93 = vld [vmem:[#allocation7 + $0x10] sm:$0xff]
    %v94 = vld [vmem:[#allocation7 + $0x18] sm:$0xff]
    %v95 = vld [vmem:[#allocation7 + $0x20] sm:$0xff]
    %v96 = vld [vmem:[#allocation7 + $0x28] sm:$0xff]
    %v97 = vld [vmem:[#allocation7 + $0x30] sm:$0xff]
    %v98 = vld [vmem:[#allocation7 + $0x38] sm:$0xff]
    %v99 = vld [vmem:[#allocation7 + $0x40] sm:$0xff]
    %v100 = vld [vmem:[#allocation7 + $0x48] sm:$0xff]
    %v101 = vld [vmem:[#allocation7 + $0x50] sm:$0xff]
    %v102 = vld [vmem:[#allocation7 + $0x58] sm:$0xff]
    %v103 = vld [vmem:[#allocation7 + $0x60] sm:$0xff]
    %v104 = vld [vmem:[#allocation7 + $0x68] sm:$0xff]
    %v105 = vld [vmem:[#allocation7 + $0x70] sm:$0xff]
    %v106 = vld [vmem:[#allocation7 + $0x78] sm:$0xff]
    %v107 = vld [vmem:[#allocation7 + $0x80] sm:$0xff]
    %v108 = vld [vmem:[#allocation7 + $0x88] sm:$0xff]
    %v109 = vld [vmem:[#allocation7 + $0x90] sm:$0xff]
    %v110 = vld [vmem:[#allocation7 + $0x98] sm:$0xff]
    %v111 = vld [vmem:[#allocation7 + $0xa0] sm:$0xff]
    %v112 = vld [vmem:[#allocation7 + $0xa8] sm:$0xff]
    %v113 = vld [vmem:[#allocation7 + $0xb0] sm:$0xff]
    %v114 = vld [vmem:[#allocation7 + $0xb8] sm:$0xff]
    %v115 = vld [vmem:[#allocation7 + $0xc0] sm:$0xff]
    %v116 = vld [vmem:[#allocation7 + $0xc8] sm:$0xff]
    %v117 = vld [vmem:[#allocation7 + $0xd0] sm:$0xff]
    %v118 = vld [vmem:[#allocation7 + $0xd8] sm:$0xff]
    %v119 = vld [vmem:[#allocation7 + $0xe0] sm:$0xff]
    %v120 = vld [vmem:[#allocation7 + $0xe8] sm:$0xff]
    %v121 = vld [vmem:[#allocation7 + $0xf0] sm:$0xff]
    %v122 = vld [vmem:[#allocation7 + $0xf8] sm:$0xff]
    %v123 = vld [vmem:[#allocation7 + $0x100] sm:$0xff]
    %v124 = vld [vmem:[#allocation7 + $0x108] sm:$0xff]
    %v125 = vld [vmem:[#allocation7 + $0x110] sm:$0xff]
    %v126 = vld [vmem:[#allocation7 + $0x118] sm:$0xff]
    %v127 = vld [vmem:[#allocation7 + $0x120] sm:$0xff]
    %v128 = vld [vmem:[#allocation7 + $0x128] sm:$0xff]
    %v129 = vld [vmem:[#allocation7 + $0x130] sm:$0xff]
    %v130 = vld [vmem:[#allocation7 + $0x138] sm:$0xff]
    %v131 = vld [vmem:[#allocation7 + $0x140] sm:$0xff]
    %v132 = vld [vmem:[#allocation7 + $0x148] sm:$0xff]
    %v133 = vld [vmem:[#allocation7 + $0x150] sm:$0xff]
    %v134 = vld [vmem:[#allocation7 + $0x158] sm:$0xff]
    %v135 = vld [vmem:[#allocation7 + $0x160] sm:$0xff]
    %v136 = vld [vmem:[#allocation7 + $0x168] sm:$0xff]
    %v137 = vld [vmem:[#allocation7 + $0x170] sm:$0xff]
    %v138 = vld [vmem:[#allocation7 + $0x178] sm:$0xff]
    %v140 = vlaneseq
    %v141 = vshrl.u32 %v140, 7
    %v142 = vsub.s32 0, %v141
    %v143 = vrot.slane %v88, %v142
    %v144 = vlaneseq
    %v145 = vshrl.u32 %v144, 7
    %v146 = vsub.s32 1, %v145
    %v147 = vrot.slane %v88, %v146
    %v148 = vlaneseq
    %v149 = vshrl.u32 %v148, 7
    %v150 = vsub.s32 2, %v149
    %v151 = vrot.slane %v88, %v150
    %155 = vmatprep.subr.mxu0 %v137
    %156 = vmatpush1.msra.mxu0 %v136
    %157 = vmatprep.subr.mxu0 %v134
    %158 = vmatpush1.msra.mxu0 %v133
    %159 = vmatprep.subr.mxu0 %v131
    %160 = vmatpush1.msra.mxu0 %v130
    %161 = vmatprep.subr.mxu0 %v128
    %162 = vmatpush1.msra.mxu0 %v127
    %163 = vmatprep.subr.mxu0 %v125
    %164 = vmatpush1.msra.mxu0 %v124
    %165 = vmatprep.subr.mxu0 %v122
    %166 = vmatpush1.msra.mxu0 %v121
    %167 = vmatprep.subr.mxu0 %v119
    %168 = vmatpush1.msra.mxu0 %v118
    %169 = vmatprep.subr.mxu0 %v116
    %170 = vmatpush1.msra.mxu0 %v115
    %171 = vmatprep.subr.mxu0 %v113
    %172 = vmatpush1.msra.mxu0 %v112
    %173 = vmatprep.subr.mxu0 %v110
    %174 = vmatpush1.msra.mxu0 %v109
    %175 = vmatprep.subr.mxu0 %v107
    %176 = vmatpush1.msra.mxu0 %v106
    %177 = vmatprep.subr.mxu0 %v104
    %178 = vmatpush1.msra.mxu0 %v103
    %179 = vmatprep.subr.mxu0 %v101
    %180 = vmatpush1.msra.mxu0 %v100
    %181 = vmatprep.subr.mxu0 %v98
    %182 = vmatpush1.msra.mxu0 %v97
    %183 = vmatprep.subr.mxu0 %v95
    %184 = vmatpush1.msra.mxu0 %v94
    %185 = vmatprep.subr.mxu0 %v92
    %186 = vmatpush1.msra.mxu0 %v91
    %187 = vmatprep.subr.mxu0 0.0
    %188 = vmatpush2.msra.mxu0 0.0
    %189 = vmatprep.subr.mxu0 0.0
    %190 = vmatpush2.msra.mxu0 0.0
    %191 = vmatprep.subr.mxu0 0.0
    %192 = vmatpush2.msra.mxu0 0.0
    %193 = vmatprep.subr.mxu0 0.0
    %194 = vmatpush2.msra.mxu0 0.0
    %195 = vmatprep.subr.mxu0 0.0
    %196 = vmatpush2.msra.mxu0 0.0
    %197 = vmatprep.subr.mxu0 0.0
    %198 = vmatpush2.msra.mxu0 0.0
    %199 = vmatprep.subr.mxu0 0.0
    %200 = vmatpush2.msra.mxu0 0.0
    %201 = vmatprep.subr.mxu0 0.0
    %202 = vmatpush2.msra.mxu0 0.0
    %203 = vmatprep.subr.mxu0 0.0
    %204 = vmatpush2.msra.mxu0 0.0
    %205 = vmatprep.subr.mxu0 0.0
    %206 = vmatpush2.msra.mxu0 0.0
    %207 = vmatprep.subr.mxu0 0.0
    %208 = vmatpush2.msra.mxu0 0.0
    %209 = vmatprep.subr.mxu0 0.0
    %210 = vmatpush2.msra.mxu0 0.0
    %211 = vmatprep.subr.mxu0 0.0
    %212 = vmatpush2.msra.mxu0 0.0
    %213 = vmatprep.subr.mxu0 0.0
    %214 = vmatpush2.msra.mxu0 0.0
    %215 = vmatprep.subr.mxu0 0.0
    %216 = vmatpush2.msra.mxu0 0.0
    %217 = vmatprep.subr.mxu0 0.0
    %218 = vmatpush2.msra.mxu0 0.0
    %219 = vmatprep.mubr.f32.mxu0 0.0
    %220 = vmatmul.mubr.f32.gmra.mxu0 %v89
    %v221 = vpop.f32.mrf.mxu0
    %v222 = vadd.f32 %v143, %v221
    %v223 = vpop.f32.mrf.mxu0
    %v224 = vadd.f32 %v147, %v223
    %225 = vdwg.mxu0
    %226 = vmatprep.subr.mxu0 0.0
    %227 = vmatpush1.msra.mxu0 %v138
    %228 = vmatprep.subr.mxu0 0.0
    %229 = vmatpush1.msra.mxu0 %v135
    %230 = vmatprep.subr.mxu0 0.0
    %231 = vmatpush1.msra.mxu0 %v132
    %232 = vmatprep.subr.mxu0 0.0
    %233 = vmatpush1.msra.mxu0 %v129
    %234 = vmatprep.subr.mxu0 0.0
    %235 = vmatpush1.msra.mxu0 %v126
    %236 = vmatprep.subr.mxu0 0.0
    %237 = vmatpush1.msra.mxu0 %v123
    %238 = vmatprep.subr.mxu0 0.0
    %239 = vmatpush1.msra.mxu0 %v120
    %240 = vmatprep.subr.mxu0 0.0
    %241 = vmatpush1.msra.mxu0 %v117
    %242 = vmatprep.subr.mxu0 0.0
    %243 = vmatpush1.msra.mxu0 %v114
    %244 = vmatprep.subr.mxu0 0.0
    %245 = vmatpush1.msra.mxu0 %v111
    %246 = vmatprep.subr.mxu0 0.0
    %247 = vmatpush1.msra.mxu0 %v108
    %248 = vmatprep.subr.mxu0 0.0
    %249 = vmatpush1.msra.mxu0 %v105
    %250 = vmatprep.subr.mxu0 0.0
    %251 = vmatpush1.msra.mxu0 %v102
    %252 = vmatprep.subr.mxu0 0.0
    %253 = vmatpush1.msra.mxu0 %v99
    %254 = vmatprep.subr.mxu0 0.0
    %255 = vmatpush1.msra.mxu0 %v96
    %256 = vmatprep.subr.mxu0 0.0
    %257 = vmatpush1.msra.mxu0 %v93
    %258 = vmatprep.subr.mxu0 0.0
    %259 = vmatpush2.msra.mxu0 0.0
    %260 = vmatprep.subr.mxu0 0.0
    %261 = vmatpush2.msra.mxu0 0.0
    %262 = vmatprep.subr.mxu0 0.0
    %263 = vmatpush2.msra.mxu0 0.0
    %264 = vmatprep.subr.mxu0 0.0
    %265 = vmatpush2.msra.mxu0 0.0
    %266 = vmatprep.subr.mxu0 0.0
    %267 = vmatpush2.msra.mxu0 0.0
    %268 = vmatprep.subr.mxu0 0.0
    %269 = vmatpush2.msra.mxu0 0.0
    %270 = vmatprep.subr.mxu0 0.0
    %271 = vmatpush2.msra.mxu0 0.0
    %272 = vmatprep.subr.mxu0 0.0
    %273 = vmatpush2.msra.mxu0 0.0
    %274 = vmatprep.subr.mxu0 0.0
    %275 = vmatpush2.msra.mxu0 0.0
    %276 = vmatprep.subr.mxu0 0.0
    %277 = vmatpush2.msra.mxu0 0.0
    %278 = vmatprep.subr.mxu0 0.0
    %279 = vmatpush2.msra.mxu0 0.0
    %280 = vmatprep.subr.mxu0 0.0
    %281 = vmatpush2.msra.mxu0 0.0
    %282 = vmatprep.subr.mxu0 0.0
    %283 = vmatpush2.msra.mxu0 0.0
    %284 = vmatprep.subr.mxu0 0.0
    %285 = vmatpush2.msra.mxu0 0.0
    %286 = vmatprep.subr.mxu0 0.0
    %287 = vmatpush2.msra.mxu0 0.0
    %288 = vmatprep.subr.mxu0 0.0
    %289 = vmatpush2.msra.mxu0 0.0
    %290 = vmatprep.mubr.f32.mxu0 0.0
    %291 = vmatmul.mubr.f32.gmra.mxu0 %v89
    %v292 = vpop.f32.mrf.mxu0
    %v293 = vadd.f32 %v151, %v292
    %v294 = vpop.f32.mrf.mxu0
    %295 = vdwg.mxu0
    %v296 = vld [vmem:[#allocation8] sm:$0xff]
    %v297 = vld [vmem:[#allocation8 + $0x8] sm:$0xff]
    %v298 = vld [vmem:[#allocation8 + $0x10] sm:$0xff]
    %v299 = vld [vmem:[#allocation8 + $0x18] sm:$0xff]
    %v300 = vld [vmem:[#allocation8 + $0x20] sm:$0xff]
    %v301 = vld [vmem:[#allocation8 + $0x28] sm:$0xff]
    %v302 = vld [vmem:[#allocation8 + $0x30] sm:$0xff]
    %v303 = vld [vmem:[#allocation8 + $0x38] sm:$0xff]
    %v304 = vld [vmem:[#allocation8 + $0x40] sm:$0xff]
    %v305 = vld [vmem:[#allocation8 + $0x48] sm:$0xff]
    %v306 = vld [vmem:[#allocation8 + $0x50] sm:$0xff]
    %v307 = vld [vmem:[#allocation8 + $0x58] sm:$0xff]
    %v308 = vld [vmem:[#allocation8 + $0x60] sm:$0xff]
    %v309 = vld [vmem:[#allocation8 + $0x68] sm:$0xff]
    %v310 = vld [vmem:[#allocation8 + $0x70] sm:$0xff]
    %v311 = vld [vmem:[#allocation8 + $0x78] sm:$0xff]
    %v312 = vld [vmem:[#allocation8 + $0x80] sm:$0xff]
    %v313 = vld [vmem:[#allocation8 + $0x88] sm:$0xff]
    %v314 = vld [vmem:[#allocation8 + $0x90] sm:$0xff]
    %v315 = vld [vmem:[#allocation8 + $0x98] sm:$0xff]
    %v316 = vld [vmem:[#allocation8 + $0xa0] sm:$0xff]
    %v317 = vld [vmem:[#allocation8 + $0xa8] sm:$0xff]
    %v318 = vld [vmem:[#allocation8 + $0xb0] sm:$0xff]
    %v319 = vld [vmem:[#allocation8 + $0xb8] sm:$0xff]
    %v320 = vld [vmem:[#allocation8 + $0xc0] sm:$0xff]
    %v321 = vld [vmem:[#allocation8 + $0xc8] sm:$0xff]
    %v322 = vld [vmem:[#allocation8 + $0xd0] sm:$0xff]
    %v323 = vld [vmem:[#allocation8 + $0xd8] sm:$0xff]
    %v324 = vld [vmem:[#allocation8 + $0xe0] sm:$0xff]
    %v325 = vld [vmem:[#allocation8 + $0xe8] sm:$0xff]
    %v326 = vld [vmem:[#allocation8 + $0xf0] sm:$0xff]
    %v327 = vld [vmem:[#allocation8 + $0xf8] sm:$0xff]
    %328 = vmatprep.subr.mxu0 %v327
    %329 = vmatpush1.msra.mxu0 %v326
    %330 = vmatprep.subr.mxu0 %v325
    %331 = vmatpush1.msra.mxu0 %v324
    %332 = vmatprep.subr.mxu0 %v323
    %333 = vmatpush1.msra.mxu0 %v322
    %334 = vmatprep.subr.mxu0 %v321
    %335 = vmatpush1.msra.mxu0 %v320
    %336 = vmatprep.subr.mxu0 %v319
    %337 = vmatpush1.msra.mxu0 %v318
    %338 = vmatprep.subr.mxu0 %v317
    %339 = vmatpush1.msra.mxu0 %v316
    %340 = vmatprep.subr.mxu0 %v315
    %341 = vmatpush1.msra.mxu0 %v314
    %342 = vmatprep.subr.mxu0 %v313
    %343 = vmatpush1.msra.mxu0 %v312
    %344 = vmatprep.subr.mxu0 %v311
    %345 = vmatpush1.msra.mxu0 %v310
    %346 = vmatprep.subr.mxu0 %v309
    %347 = vmatpush1.msra.mxu0 %v308
    %348 = vmatprep.subr.mxu0 %v307
    %349 = vmatpush1.msra.mxu0 %v306
    %350 = vmatprep.subr.mxu0 %v305
    %351 = vmatpush1.msra.mxu0 %v304
    %352 = vmatprep.subr.mxu0 %v303
    %353 = vmatpush1.msra.mxu0 %v302
    %354 = vmatprep.subr.mxu0 %v301
    %355 = vmatpush1.msra.mxu0 %v300
    %356 = vmatprep.subr.mxu0 %v299
    %357 = vmatpush1.msra.mxu0 %v298
    %358 = vmatprep.subr.mxu0 %v297
    %359 = vmatpush1.msra.mxu0 %v296
    %360 = vmatprep.subr.mxu0 0.0
    %361 = vmatpush2.msra.mxu0 0.0
    %362 = vmatprep.subr.mxu0 0.0
    %363 = vmatpush2.msra.mxu0 0.0
    %364 = vmatprep.subr.mxu0 0.0
    %365 = vmatpush2.msra.mxu0 0.0
    %366 = vmatprep.subr.mxu0 0.0
    %367 = vmatpush2.msra.mxu0 0.0
    %368 = vmatprep.subr.mxu0 0.0
    %369 = vmatpush2.msra.mxu0 0.0
    %370 = vmatprep.subr.mxu0 0.0
    %371 = vmatpush2.msra.mxu0 0.0
    %372 = vmatprep.subr.mxu0 0.0
    %373 = vmatpush2.msra.mxu0 0.0
    %374 = vmatprep.subr.mxu0 0.0
    %375 = vmatpush2.msra.mxu0 0.0
    %376 = vmatprep.subr.mxu0 0.0
    %377 = vmatpush2.msra.mxu0 0.0
    %378 = vmatprep.subr.mxu0 0.0
    %379 = vmatpush2.msra.mxu0 0.0
    %380 = vmatprep.subr.mxu0 0.0
    %381 = vmatpush2.msra.mxu0 0.0
    %382 = vmatprep.subr.mxu0 0.0
    %383 = vmatpush2.msra.mxu0 0.0
    %384 = vmatprep.subr.mxu0 0.0
    %385 = vmatpush2.msra.mxu0 0.0
    %386 = vmatprep.subr.mxu0 0.0
    %387 = vmatpush2.msra.mxu0 0.0
    %388 = vmatprep.subr.mxu0 0.0
    %389 = vmatpush2.msra.mxu0 0.0
    %390 = vmatprep.subr.mxu0 0.0
    %391 = vmatpush2.msra.mxu0 0.0
    %392 = vmatprep.mubr.f32.mxu0 0.0
    %393 = vmatmul.mubr.f32.gmra.mxu0 %v90
    %v394 = vpop.f32.mrf.mxu0
    %v395 = vadd.f32 0.0, %v394
    %v396 = vpop.f32.mrf.mxu0
    %v397 = vadd.f32 0.0, %v396
    %398 = vdwg.mxu0
    %v399 = vadd.f32 %v222, %v395
    %v400 = vxor.u32 %v399, 2147483648
    %v401 = vmul.f32 %v400, 1.442695
    %v402 = vpow.pop %v401
    %v403 = vadd.f32 %v402, 1.0
    %v404 = vrcp.pop %v403
    %v405 = vmul.f32 1.0, %v404
    %v406 = vadd.f32 %v224, %v397
    %v407 = vxor.u32 %v406, 2147483648
    %v408 = vmul.f32 %v407, 1.442695
    %v409 = vpow.pop %v408
    %v410 = vadd.f32 %v409, 1.0
    %v411 = vrcp.pop %v410
    %v412 = vmul.f32 1.0, %v411
    %v413 = vmul.f32 %v90, %v412
    %v414 = vld [vmem:[#allocation10] sm:$0xff]
    %v415 = vld [vmem:[#allocation10 + $0x8] sm:$0xff]
    %v416 = vld [vmem:[#allocation10 + $0x10] sm:$0xff]
    %v417 = vld [vmem:[#allocation10 + $0x18] sm:$0xff]
    %v418 = vld [vmem:[#allocation10 + $0x20] sm:$0xff]
    %v419 = vld [vmem:[#allocation10 + $0x28] sm:$0xff]
    %v420 = vld [vmem:[#allocation10 + $0x30] sm:$0xff]
    %v421 = vld [vmem:[#allocation10 + $0x38] sm:$0xff]
    %v422 = vld [vmem:[#allocation10 + $0x40] sm:$0xff]
    %v423 = vld [vmem:[#allocation10 + $0x48] sm:$0xff]
    %v424 = vld [vmem:[#allocation10 + $0x50] sm:$0xff]
    %v425 = vld [vmem:[#allocation10 + $0x58] sm:$0xff]
    %v426 = vld [vmem:[#allocation10 + $0x60] sm:$0xff]
    %v427 = vld [vmem:[#allocation10 + $0x68] sm:$0xff]
    %v428 = vld [vmem:[#allocation10 + $0x70] sm:$0xff]
    %v429 = vld [vmem:[#allocation10 + $0x78] sm:$0xff]
    %430 = vmatprep.subr.mxu0 0.0
    %431 = vmatpush1.msra.mxu0 %v429
    %432 = vmatprep.subr.mxu0 0.0
    %433 = vmatpush1.msra.mxu0 %v428
    %434 = vmatprep.subr.mxu0 0.0
    %435 = vmatpush1.msra.mxu0 %v427
    %436 = vmatprep.subr.mxu0 0.0
    %437 = vmatpush1.msra.mxu0 %v426
    %438 = vmatprep.subr.mxu0 0.0
    %439 = vmatpush1.msra.mxu0 %v425
    %440 = vmatprep.subr.mxu0 0.0
    %441 = vmatpush1.msra.mxu0 %v424
    %442 = vmatprep.subr.mxu0 0.0
    %443 = vmatpush1.msra.mxu0 %v423
    %444 = vmatprep.subr.mxu0 0.0
    %445 = vmatpush1.msra.mxu0 %v422
    %446 = vmatprep.subr.mxu0 0.0
    %447 = vmatpush1.msra.mxu0 %v421
    %448 = vmatprep.subr.mxu0 0.0
    %449 = vmatpush1.msra.mxu0 %v420
    %450 = vmatprep.subr.mxu0 0.0
    %451 = vmatpush1.msra.mxu0 %v419
    %452 = vmatprep.subr.mxu0 0.0
    %453 = vmatpush1.msra.mxu0 %v418
    %454 = vmatprep.subr.mxu0 0.0
    %455 = vmatpush1.msra.mxu0 %v417
    %456 = vmatprep.subr.mxu0 0.0
    %457 = vmatpush1.msra.mxu0 %v416
    %458 = vmatprep.subr.mxu0 0.0
    %459 = vmatpush1.msra.mxu0 %v415
    %460 = vmatprep.subr.mxu0 0.0
    %461 = vmatpush1.msra.mxu0 %v414
    %462 = vmatprep.subr.mxu0 0.0
    %463 = vmatpush2.msra.mxu0 0.0
    %464 = vmatprep.subr.mxu0 0.0
    %465 = vmatpush2.msra.mxu0 0.0
    %466 = vmatprep.subr.mxu0 0.0
    %467 = vmatpush2.msra.mxu0 0.0
    %468 = vmatprep.subr.mxu0 0.0
    %469 = vmatpush2.msra.mxu0 0.0
    %470 = vmatprep.subr.mxu0 0.0
    %471 = vmatpush2.msra.mxu0 0.0
    %472 = vmatprep.subr.mxu0 0.0
    %473 = vmatpush2.msra.mxu0 0.0
    %474 = vmatprep.subr.mxu0 0.0
    %475 = vmatpush2.msra.mxu0 0.0
    %476 = vmatprep.subr.mxu0 0.0
    %477 = vmatpush2.msra.mxu0 0.0
    %478 = vmatprep.subr.mxu0 0.0
    %479 = vmatpush2.msra.mxu0 0.0
    %480 = vmatprep.subr.mxu0 0.0
    %481 = vmatpush2.msra.mxu0 0.0
    %482 = vmatprep.subr.mxu0 0.0
    %483 = vmatpush2.msra.mxu0 0.0
    %484 = vmatprep.subr.mxu0 0.0
    %485 = vmatpush2.msra.mxu0 0.0
    %486 = vmatprep.subr.mxu0 0.0
    %487 = vmatpush2.msra.mxu0 0.0
    %488 = vmatprep.subr.mxu0 0.0
    %489 = vmatpush2.msra.mxu0 0.0
    %490 = vmatprep.subr.mxu0 0.0
    %491 = vmatpush2.msra.mxu0 0.0
    %492 = vmatprep.subr.mxu0 0.0
    %493 = vmatpush2.msra.mxu0 0.0
    %494 = vmatprep.mubr.f32.mxu0 0.0
    %495 = vmatmul.mubr.f32.gmra.mxu0 %v413
    %v496 = vpop.f32.mrf.mxu0
    %v497 = vadd.f32 0.0, %v496
    %v498 = vpop.f32.mrf.mxu0
    %499 = vdwg.mxu0
    %v500 = vadd.f32 %v293, %v497
    %v501 = vtanh.pop %v500
    %v502 = vsub.f32 %v501, %v90
    %v503 = vmul.f32 %v405, %v502
    %v504 = vadd.f32 %v90, %v503
    %505 = vst [vmem:[#allocation11] sm:$0xff] %v504
    // Predicated region
    $region46: #{tpu_custom_call.1} parent=1 // pred_check
      _
    $region47: #{tpu_custom_call.1} parent=1 // pred_check_branch
      %507 = sbr.rel (0) target = $region49
    $region48: #{tpu_custom_call.1} parent=1 // pred_region
      %s509 = ssub.s32 128, 128
      %510 = vsyncadd [#allocation4], %s509
      %s512 = sshll.u32 [#allocation11], 4
      %s513 = int_to_ptr.vmem [resolvable:$true] %s512
      %515 = dma.vmem_to_hbm [thread:$0]  %s513, 128, %s6, [#allocation4]
    $region49: #{tpu_custom_call.1} parent=1 // pred_fallthru
      _
    // Predicated region
    $region50: #{tpu_custom_call.1} parent=1 // pred_check
      _
    $region51: #{tpu_custom_call.1} parent=1 // pred_check_branch
      %517 = sbr.rel (0) target = $region53
    $region52: #{tpu_custom_call.1} parent=1 // pred_region
      %518 = dma.done [#allocation4], 128
    $region53: #{tpu_custom_call.1} parent=1 // pred_fallthru
      _
    %519 = vsyncpa [#allocation3], 1
    %520 = vsyncpa [#allocation6], 1
    %521 = vsyncpa [#allocation9], 1
    %522 = vsyncpa [#allocation4], 1

</llo_original>
